<compile_context>
chip_gen: v5e
topology: v5e:2x2
jax: 0.10.0
libtpu: 0.0.40
codegen_flags: <defaults>
</compile_context>

<pallas_src>
import jax
import jax.numpy as jnp
from jax import lax
from jax.experimental import pallas as pl
from jax.experimental.pallas import tpu as pltpu

EPS = 1e-5
C1, K1, PAD1 = 16, 5, 2      # conv1_*: Conv1d(1, 16, k=5, pad=2)
K2, PAD2 = 9, 4              # conv2_*: Conv1d(16, 1, k=9, pad=4)
FC1_PAD = 1024               # fc1/bn(1000) padded to a lane-dense 1024
FC2_PAD = 128                # fc2(100) padded to a lane-dense 128

# Rows of the packed small-vector operand (all f32, width FC1_PAD, zero padded)
R_B1, R_G1F, R_B1F, R_B2, R_G2, R_BB2, R_BFC1, R_G3, R_BB3, R_BFC2 = range(10)


# ---------------------------------------------------------------------------
# One-time parameter preparation (done at init, NOT per forward call).
# ---------------------------------------------------------------------------
def prepare_params(p, input_dim):
    D = input_dim
    F = C1 * D                       # flat conv1 feature count, index f = c*D + l
    f32, bf16 = jnp.float32, jnp.bfloat16

    # conv1 folded into a banded matrix: y[b, c*D + l] = sum_m x[b, m] * M[m, c*D + l]
    def conv1_banded(w):             # (16, 1, 5) -> (D, 16*D)
        w2 = w[:, 0, :]
        m = jnp.arange(D)[:, None, None]
        c = jnp.arange(C1)[None, :, None]
        l = jnp.arange(D)[None, None, :]
        tap = m - l + PAD1
        band = jnp.where((tap >= 0) & (tap < K1), w2[c, jnp.clip(tap, 0, K1 - 1)], 0.0)
        return band.reshape(D, F).astype(f32)

    # conv2 folded into a banded matrix acting on the flat (c*D + m) layout.
    def conv2_banded(w):             # (1, 16, 9) -> (16*D, D)
        w2 = w[0]
        c = jnp.arange(C1)[:, None, None]
        m = jnp.arange(D)[None, :, None]
        l = jnp.arange(D)[None, None, :]
        tap = m - l + PAD2
        band = jnp.where((tap >= 0) & (tap < K2), w2[c, jnp.clip(tap, 0, K2 - 1)], 0.0)
        return band.reshape(F, D).astype(f32)

    # Left || Right gate weights concatenated -> one dot per conv stage.
    m1 = jnp.concatenate([conv1_banded(p["conv1_left_w"]),
                          conv1_banded(p["conv1_right_w"])], axis=1)      # (D, 2F)
    m2 = jnp.concatenate([conv2_banded(p["conv2_left_w"]),
                          conv2_banded(p["conv2_right_w"])], axis=1)      # (F, 2D)

    # bn_conv grouping: PyTorch reshapes (B,16,D)->(B,D,16); the BN channel of
    # flat index f is f // 16.  grp[f, i] = 1{f//16 == i} (exact in bf16).
    f = jnp.arange(F)
    grp = (f[:, None] // 16 == jnp.arange(D)[None, :]).astype(f32)        # (F, D)
    grp_idx = f // 16

    # fc1 / fc2 padded to dense MXU tiles (padded gamma/beta/weights are zero,
    # so padded lanes stay exactly 0 through BN/ReLU/fc2).
    w_fc1 = jnp.zeros((D, FC1_PAD), f32).at[:, :1000].set(p["fc1_left_w"].T)
    w_fc2 = jnp.zeros((FC1_PAD, FC2_PAD), f32).at[:1000, :100].set(p["fc2_left_w"].T)

    # All small per-feature vectors packed into ONE array (fewer input DMAs).
    vecs = jnp.zeros((10, FC1_PAD), f32)
    vecs = vecs.at[R_B1, :2 * F].set(jnp.concatenate(
        [jnp.repeat(p["conv1_left_b"], D), jnp.repeat(p["conv1_right_b"], D)]))
    vecs = vecs.at[R_G1F, :F].set(p["bn_conv_w"][grp_idx])    # gamma broadcast to flat
    vecs = vecs.at[R_B1F, :F].set(p["bn_conv_b"][grp_idx])    # beta broadcast to flat
    vecs = vecs.at[R_B2, :2 * D].set(jnp.concatenate(
        [jnp.full((D,), p["conv2_left_b"][0]), jnp.full((D,), p["conv2_right_b"][0])]))
    vecs = vecs.at[R_G2, :D].set(p["bn_conv2_w"])
    vecs = vecs.at[R_BB2, :D].set(p["bn_conv2_b"])
    vecs = vecs.at[R_BFC1, :1000].set(p["fc1_left_b"])
    vecs = vecs.at[R_G3, :1000].set(p["bn_w"])
    vecs = vecs.at[R_BB3, :1000].set(p["bn_b"])
    vecs = vecs.at[R_BFC2, :100].set(p["fc2_left_b"])

    return {
        "m1": m1.astype(bf16),             # (D, 2*16*D)    bf16
        "m2": m2.astype(bf16),             # (16*D, 2*D)    bf16
        "grp": grp.astype(bf16),           # (16*D, D)      bf16 (0/1, exact)
        "grp_t": grp.T.astype(bf16),       # (D, 16*D)      bf16
        "w_fc1": w_fc1.astype(bf16),       # (D, 1024)      bf16
        "w_fc2": w_fc2.astype(bf16),       # (1024, 128)    bf16
        "vecs": vecs,                      # (10, 1024)     f32
    }


# ---------------------------------------------------------------------------
# The single fused Pallas kernel.
# ---------------------------------------------------------------------------
def _fused_kernel(x_ref, m1_ref, grp_ref, grpt_ref, m2_ref, wf1_ref, vec_ref,
                  wf2_hbm_ref, o_ref, wf2_vmem, dma_sem):
    f32 = jnp.float32

    # Prefetch fc2 weights (largest operand) so the HBM->VMEM DMA overlaps with
    # the conv / BN stages; only wait right before the final matmul.
    fc2_copy = pltpu.make_async_copy(wf2_hbm_ref, wf2_vmem, dma_sem)
    fc2_copy.start()

    x = x_ref[...]                                   # (B, D) f32
    B, D = x.shape
    F = C1 * D

    def mxu(act, w):
        # ~f32-accurate (f32 act x bf16 weight) matmul using ONE single-pass
        # bf16 dot: split act into hi/lo bf16 parts, stack them on the sublane
        # axis (M doubles, which is free), and add the two output halves.
        hi = act.astype(jnp.bfloat16)
        lo = (act - hi.astype(f32)).astype(jnp.bfloat16)
        r = act.shape[0]
        out = jnp.dot(jnp.concatenate([hi, lo], axis=0), w,
                      preferred_element_type=f32)
        return out[:r] + out[r:]

    # ---- conv1_left || conv1_right (banded matmul) + GLU -------------------
    y1 = mxu(x, m1_ref[...]) + vec_ref[R_B1:R_B1 + 1, :2 * F]        # (B, 2F)
    g1 = y1[:, :F] * jax.nn.sigmoid(y1[:, F:])                        # (B, F)

    # ---- bn_conv: channel = flat//16, stats over (batch, 16) ----------------
    # Centered two-pass formula (grouped mean -> broadcast -> grouped sum of
    # centered squares).  Four tiny single-pass dots with the 0/1 grouping
    # matrices; no E[x^2]-E[x]^2 cancellation anywhere.
    n1 = float(C1 * B)
    s1 = mxu(jnp.sum(g1, axis=0, keepdims=True), grp_ref[...])        # (1, D)
    mean1f = mxu(s1 / n1, grpt_ref[...])                              # (1, F)
    cen1 = g1 - mean1f
    q1 = mxu(jnp.sum(cen1 * cen1, axis=0, keepdims=True), grp_ref[...])
    rstd1f = mxu(lax.rsqrt(q1 / n1 + EPS), grpt_ref[...])             # (1, F)
    x2 = jnp.maximum(cen1 * (rstd1f * vec_ref[R_G1F:R_G1F + 1, :F])
                     + vec_ref[R_B1F:R_B1F + 1, :F], 0.0)             # (B, F)

    # ---- conv2_left || conv2_right (banded matmul) + GLU --------------------
    y2 = mxu(x2, m2_ref[...]) + vec_ref[R_B2:R_B2 + 1, :2 * D]        # (B, 2D)
    g2 = y2[:, :D] * jax.nn.sigmoid(y2[:, D:])                        # (B, D)

    # ---- bn_conv2 (per position, stats over batch) + ReLU -------------------
    mean2 = jnp.sum(g2, axis=0, keepdims=True) / B
    c2 = g2 - mean2
    var2 = jnp.sum(c2 * c2, axis=0, keepdims=True) / B
    x3 = jnp.maximum(c2 * lax.rsqrt(var2 + EPS) * vec_ref[R_G2:R_G2 + 1, :D]
                     + vec_ref[R_BB2:R_BB2 + 1, :D], 0.0)             # (B, D)

    # ---- fc1_left (padded to 1024 lanes) -------------------------------------
    h = mxu(x3, wf1_ref[...]) + vec_ref[R_BFC1:R_BFC1 + 1, :]         # (B, 1024)

    # ---- bn (1000 features, stats over batch) + ReLU -------------------------
    # Padded lanes have gamma = beta = 0, so they stay exactly 0 (no NaN).
    mean3 = jnp.sum(h, axis=0, keepdims=True) / B
    c3 = h - mean3
    var3 = jnp.sum(c3 * c3, axis=0, keepdims=True) / B
    h2 = jnp.maximum(c3 * lax.rsqrt(var3 + EPS) * vec_ref[R_G3:R_G3 + 1, :]
                     + vec_ref[R_BB3:R_BB3 + 1, :], 0.0)              # (B, 1024)

    # ---- fc2_left (lane-dense 128-wide output) --------------------------------
    fc2_copy.wait()
    o_ref[...] = mxu(h2, wf2_vmem[...]) + vec_ref[R_BFC2:R_BFC2 + 1, :o_ref.shape[1]]


def fused_forward(x, kp):
    """x: (B, input_dim) f32; kp: output of prepare_params.  Returns (B, 100)."""
    batch = x.shape[0]
    out = pl.pallas_call(
        _fused_kernel,
        out_shape=jax.ShapeDtypeStruct((batch, FC2_PAD), jnp.float32),
        in_specs=[
            pl.BlockSpec(memory_space=pltpu.MemorySpace.VMEM),   # x
            pl.BlockSpec(memory_space=pltpu.MemorySpace.VMEM),   # m1 (conv1 L||R)
            pl.BlockSpec(memory_space=pltpu.MemorySpace.VMEM),   # grp
            pl.BlockSpec(memory_space=pltpu.MemorySpace.VMEM),   # grp_t
            pl.BlockSpec(memory_space=pltpu.MemorySpace.VMEM),   # m2 (conv2 L||R)
            pl.BlockSpec(memory_space=pltpu.MemorySpace.VMEM),   # w_fc1
            pl.BlockSpec(memory_space=pltpu.MemorySpace.VMEM),   # packed vectors
            pl.BlockSpec(memory_space=pl.ANY),                   # w_fc2 (manual DMA)
        ],
        out_specs=pl.BlockSpec(memory_space=pltpu.MemorySpace.VMEM),
        scratch_shapes=[
            pltpu.VMEM(kp["w_fc2"].shape, jnp.bfloat16),         # fc2 weight landing buffer
            pltpu.SemaphoreType.DMA,
        ],
        cost_estimate=pl.CostEstimate(
            flops=2_600_000, transcendentals=4_096, bytes_accessed=620_000),
    )(x, kp["m1"], kp["grp"], kp["grp_t"], kp["m2"], kp["w_fc1"], kp["vecs"],
      kp["w_fc2"])
    return out[:, :100]     # drop the lane padding outside the kernel (free in XLA)


# ---------------------------------------------------------------------------
# Pure-JAX reference (mirrors the PyTorch forward).  Activations stay f32; the
# weights are bf16-rounded to the same values the kernel stores, so the
# comparison isolates kernel structure (the kernel's hi/lo-split dots are
# ~f32-accurate against bf16 weights).
# ---------------------------------------------------------------------------
def reference_forward(x, p):
    HI = lax.Precision.HIGHEST
    wq = lambda w: w.astype(jnp.bfloat16).astype(jnp.float32)

    def conv1d(x_, w, b, pad):
        y = lax.conv_general_dilated(x_, wq(w), (1,), [(pad, pad)],
                                     dimension_numbers=("NCH", "OIH", "NCH"),
                                     precision=HI)
        return y + b[None, :, None]

    def bn(x_, gamma, beta, axes, param_axis):
        mean = jnp.mean(x_, axis=axes, keepdims=True)
        var = jnp.mean((x_ - mean) ** 2, axis=axes, keepdims=True)
        shp = [1] * x_.ndim
        shp[param_axis] = x_.shape[param_axis]
        return (x_ - mean) * lax.rsqrt(var + EPS) * gamma.reshape(shp) + beta.reshape(shp)

    batch, input_dim = x.shape
    xp = x[:, None, :]
    xl = conv1d(xp, p["conv1_left_w"], p["conv1_left_b"], PAD1)
    xr = conv1d(xp, p["conv1_right_w"], p["conv1_right_b"], PAD1)
    g = xl * jax.nn.sigmoid(xr)
    t = bn(g.reshape(batch, input_dim, -1), p["bn_conv_w"], p["bn_conv_b"], (0, 2), 1)
    x2 = jnp.maximum(t.reshape(batch, -1, input_dim), 0.0)
    xl2 = conv1d(x2, p["conv2_left_w"], p["conv2_left_b"], PAD2)
    xr2 = conv1d(x2, p["conv2_right_w"], p["conv2_right_b"], PAD2)
    g2 = xl2 * jax.nn.sigmoid(xr2)
    t2 = bn(g2.reshape(batch, input_dim, -1), p["bn_conv2_w"], p["bn_conv2_b"], (0, 2), 1)
    x3 = jnp.maximum(t2.reshape(batch, -1, input_dim), 0.0).reshape(batch, input_dim)
    h = jnp.dot(x3, wq(p["fc1_left_w"]).T, precision=HI) + p["fc1_left_b"]
    hm = jnp.mean(h, axis=0, keepdims=True)
    hv = jnp.mean((h - hm) ** 2, axis=0, keepdims=True)
    h2 = jnp.maximum((h - hm) * lax.rsqrt(hv + EPS) * p["bn_w"] + p["bn_b"], 0.0)
    return jnp.dot(h2, wq(p["fc2_left_w"]).T, precision=HI) + p["fc2_left_b"]


# ---------------------------------------------------------------------------
# Deterministic parameter init (PyTorch-default-like; BN gamma=1, beta=0).
# Unused submodules (conv_fc, fc1_right, fc2_right) are not materialized.
# ---------------------------------------------------------------------------
def init_params(key, input_dim):
    ks = jax.random.split(key, 12)

    def u(k, shape, fan_in):
        bound = 1.0 / float(fan_in) ** 0.5
        return jax.random.uniform(k, shape, jnp.float32, -bound, bound)

    return {
        "conv1_left_w": u(ks[0], (16, 1, 5), 5),    "conv1_left_b": u(ks[1], (16,), 5),
        "conv1_right_w": u(ks[2], (16, 1, 5), 5),   "conv1_right_b": u(ks[3], (16,), 5),
        "conv2_left_w": u(ks[4], (1, 16, 9), 144),  "conv2_left_b": u(ks[5], (1,), 144),
        "conv2_right_w": u(ks[6], (1, 16, 9), 144), "conv2_right_b": u(ks[7], (1,), 144),
        "bn_conv_w": jnp.ones((input_dim,), jnp.float32),
        "bn_conv_b": jnp.zeros((input_dim,), jnp.float32),
        "bn_conv2_w": jnp.ones((input_dim,), jnp.float32),
        "bn_conv2_b": jnp.zeros((input_dim,), jnp.float32),
        "fc1_left_w": u(ks[8], (1000, input_dim), input_dim),
        "fc1_left_b": u(ks[9], (1000,), input_dim),
        "bn_w": jnp.ones((1000,), jnp.float32),
        "bn_b": jnp.zeros((1000,), jnp.float32),
        "fc2_left_w": u(ks[10], (100, 1000), 1000),
        "fc2_left_b": u(ks[11], (100,), 1000),
    }


if __name__ == "__main__":
    BATCH, INPUT_DIM = 2, 32            # num_nodes is unused by the forward pass
    root = jax.random.PRNGKey(0)
    k_params, k_x = jax.random.split(root)
    params = init_params(k_params, INPUT_DIM)
    kernel_params = prepare_params(params, INPUT_DIM)      # one-time weight prep
    x = jax.random.normal(k_x, (BATCH, INPUT_DIM), jnp.float32)

    out = jax.block_until_ready(jax.jit(fused_forward)(x, kernel_params))
    assert out.shape == (BATCH, 100), out.shape

    ref = reference_forward(x, params)
    if not bool(jnp.allclose(out, ref, atol=2e-3, rtol=2e-3)):
        raise AssertionError(
            f"Pallas output mismatch, max abs err = {float(jnp.max(jnp.abs(out - ref)))}")
    print("KERNEL_OK")
</pallas_src>

<mosaic_0001>
module attributes {stable_mosaic.version = 11 : i64} {
  func.func @_fused_kernel(%arg0: memref<2x32xf32, #tpu.memory_space<vmem>>, %arg1: memref<32x1024xbf16, #tpu.memory_space<vmem>>, %arg2: memref<512x32xbf16, #tpu.memory_space<vmem>>, %arg3: memref<32x512xbf16, #tpu.memory_space<vmem>>, %arg4: memref<512x64xbf16, #tpu.memory_space<vmem>>, %arg5: memref<32x1024xbf16, #tpu.memory_space<vmem>>, %arg6: memref<10x1024xf32, #tpu.memory_space<vmem>>, %arg7: memref<1024x128xbf16, #tpu.memory_space<any>>, %arg8: memref<2x128xf32, #tpu.memory_space<vmem>>, %arg9: memref<1024x128xbf16, #tpu.memory_space<vmem>>, %arg10: memref<!tpu.dma_semaphore, #tpu.memory_space<semaphore_mem>>) attributes {dimension_semantics = [], scalar_prefetch = 0 : i64, scratch_operands = 2 : i64, tpu.core_type = #tpu.core_type<tc>} {
    tpu.enqueue_dma source(%arg7 : memref<1024x128xbf16, #tpu.memory_space<any>>) target(%arg9 : memref<1024x128xbf16, #tpu.memory_space<vmem>>) target_semaphore(%arg10 : memref<!tpu.dma_semaphore, #tpu.memory_space<semaphore_mem>>)
    %c0 = arith.constant 0 : index
    %c0_0 = arith.constant 0 : index
    %0 = vector.load %arg0[%c0, %c0_0] : memref<2x32xf32, #tpu.memory_space<vmem>>, vector<2x32xf32>
    %c0_1 = arith.constant 0 : index
    %c0_2 = arith.constant 0 : index
    %1 = vector.load %arg1[%c0_1, %c0_2] : memref<32x1024xbf16, #tpu.memory_space<vmem>>, vector<32x1024xbf16>
    %2 = arith.truncf %0 : vector<2x32xf32> to vector<2x32xbf16>
    %3 = arith.extf %2 : vector<2x32xbf16> to vector<2x32xf32>
    %4 = arith.subf %0, %3 : vector<2x32xf32>
    %5 = arith.truncf %4 : vector<2x32xf32> to vector<2x32xbf16>
    %6 = tpu.concatenate %2, %5 in 0 : vector<2x32xbf16>, vector<2x32xbf16> -> vector<4x32xbf16>
    %cst = arith.constant dense<0.000000e+00> : vector<4x1024xf32>
    %7 = tpu.matmul %6, %1, %cst {dimension_numbers = #tpu.dot_dimension_numbers<[1], [0], [0], [1], [0, 0, 1, 1], [], []>} : vector<4x32xbf16>, vector<32x1024xbf16>, vector<4x1024xf32> -> vector<4x1024xf32>
    %8 = vector.extract_strided_slice %7 {offsets = [0, 0], sizes = [2, 1024], strides = [1, 1]} : vector<4x1024xf32> to vector<2x1024xf32>
    %9 = vector.extract_strided_slice %7 {offsets = [2, 0], sizes = [2, 1024], strides = [1, 1]} : vector<4x1024xf32> to vector<2x1024xf32>
    %10 = arith.addf %8, %9 : vector<2x1024xf32>
    %c0_3 = arith.constant 0 : index
    %c0_4 = arith.constant 0 : index
    %11 = vector.load %arg6[%c0_3, %c0_4] : memref<10x1024xf32, #tpu.memory_space<vmem>>, vector<1x1024xf32>
    %12 = vector.broadcast %11 : vector<1x1024xf32> to vector<2x1024xf32>
    %13 = arith.addf %10, %12 : vector<2x1024xf32>
    %14 = vector.extract_strided_slice %13 {offsets = [0, 0], sizes = [2, 512], strides = [1, 1]} : vector<2x1024xf32> to vector<2x512xf32>
    %15 = vector.extract_strided_slice %13 {offsets = [0, 512], sizes = [2, 512], strides = [1, 1]} : vector<2x1024xf32> to vector<2x512xf32>
    %16 = arith.negf %15 : vector<2x512xf32>
    %17 = math.exp %16 : vector<2x512xf32>
    %cst_5 = arith.constant 1.000000e+00 : f32
    %18 = vector.broadcast %cst_5 : f32 to vector<2x512xf32>
    %19 = arith.addf %18, %17 : vector<2x512xf32>
    %20 = arith.divf %18, %19 : vector<2x512xf32>
    %21 = arith.mulf %14, %20 : vector<2x512xf32>
    %cst_6 = arith.constant dense<0.000000e+00> : vector<512xf32>
    %22 = vector.multi_reduction <add>, %21, %cst_6 [0] : vector<2x512xf32> to vector<512xf32>
    %23 = vector.shape_cast %22 : vector<512xf32> to vector<1x512xf32>
    %c0_7 = arith.constant 0 : index
    %c0_8 = arith.constant 0 : index
    %24 = vector.load %arg2[%c0_7, %c0_8] : memref<512x32xbf16, #tpu.memory_space<vmem>>, vector<512x32xbf16>
    %25 = arith.truncf %23 : vector<1x512xf32> to vector<1x512xbf16>
    %26 = arith.extf %25 : vector<1x512xbf16> to vector<1x512xf32>
    %27 = arith.subf %23, %26 : vector<1x512xf32>
    %28 = arith.truncf %27 : vector<1x512xf32> to vector<1x512xbf16>
    %29 = tpu.concatenate %25, %28 in 0 : vector<1x512xbf16>, vector<1x512xbf16> -> vector<2x512xbf16>
    %cst_9 = arith.constant dense<0.000000e+00> : vector<2x32xf32>
    %30 = tpu.matmul %29, %24, %cst_9 {dimension_numbers = #tpu.dot_dimension_numbers<[1], [0], [0], [1], [0, 0, 1, 1], [], []>} : vector<2x512xbf16>, vector<512x32xbf16>, vector<2x32xf32> -> vector<2x32xf32>
    %31 = vector.extract_strided_slice %30 {offsets = [0, 0], sizes = [1, 32], strides = [1, 1]} : vector<2x32xf32> to vector<1x32xf32>
    %32 = vector.extract_strided_slice %30 {offsets = [1, 0], sizes = [1, 32], strides = [1, 1]} : vector<2x32xf32> to vector<1x32xf32>
    %33 = arith.addf %31, %32 : vector<1x32xf32>
    %cst_10 = arith.constant 3.200000e+01 : f32
    %34 = vector.broadcast %cst_10 : f32 to vector<1x32xf32>
    %35 = arith.divf %33, %34 : vector<1x32xf32>
    %c0_11 = arith.constant 0 : index
    %c0_12 = arith.constant 0 : index
    %36 = vector.load %arg3[%c0_11, %c0_12] : memref<32x512xbf16, #tpu.memory_space<vmem>>, vector<32x512xbf16>
    %37 = arith.truncf %35 : vector<1x32xf32> to vector<1x32xbf16>
    %38 = arith.extf %37 : vector<1x32xbf16> to vector<1x32xf32>
    %39 = arith.subf %35, %38 : vector<1x32xf32>
    %40 = arith.truncf %39 : vector<1x32xf32> to vector<1x32xbf16>
    %41 = tpu.concatenate %37, %40 in 0 : vector<1x32xbf16>, vector<1x32xbf16> -> vector<2x32xbf16>
    %cst_13 = arith.constant dense<0.000000e+00> : vector<2x512xf32>
    %42 = tpu.matmul %41, %36, %cst_13 {dimension_numbers = #tpu.dot_dimension_numbers<[1], [0], [0], [1], [0, 0, 1, 1], [], []>} : vector<2x32xbf16>, vector<32x512xbf16>, vector<2x512xf32> -> vector<2x512xf32>
    %43 = vector.extract_strided_slice %42 {offsets = [0, 0], sizes = [1, 512], strides = [1, 1]} : vector<2x512xf32> to vector<1x512xf32>
    %44 = vector.extract_strided_slice %42 {offsets = [1, 0], sizes = [1, 512], strides = [1, 1]} : vector<2x512xf32> to vector<1x512xf32>
    %45 = arith.addf %43, %44 : vector<1x512xf32>
    %46 = vector.broadcast %45 : vector<1x512xf32> to vector<2x512xf32>
    %47 = arith.subf %21, %46 : vector<2x512xf32>
    %48 = arith.mulf %47, %47 : vector<2x512xf32>
    %cst_14 = arith.constant dense<0.000000e+00> : vector<512xf32>
    %49 = vector.multi_reduction <add>, %48, %cst_14 [0] : vector<2x512xf32> to vector<512xf32>
    %50 = vector.shape_cast %49 : vector<512xf32> to vector<1x512xf32>
    %c0_15 = arith.constant 0 : index
    %c0_16 = arith.constant 0 : index
    %51 = vector.load %arg2[%c0_15, %c0_16] : memref<512x32xbf16, #tpu.memory_space<vmem>>, vector<512x32xbf16>
    %52 = arith.truncf %50 : vector<1x512xf32> to vector<1x512xbf16>
    %53 = arith.extf %52 : vector<1x512xbf16> to vector<1x512xf32>
    %54 = arith.subf %50, %53 : vector<1x512xf32>
    %55 = arith.truncf %54 : vector<1x512xf32> to vector<1x512xbf16>
    %56 = tpu.concatenate %52, %55 in 0 : vector<1x512xbf16>, vector<1x512xbf16> -> vector<2x512xbf16>
    %cst_17 = arith.constant dense<0.000000e+00> : vector<2x32xf32>
    %57 = tpu.matmul %56, %51, %cst_17 {dimension_numbers = #tpu.dot_dimension_numbers<[1], [0], [0], [1], [0, 0, 1, 1], [], []>} : vector<2x512xbf16>, vector<512x32xbf16>, vector<2x32xf32> -> vector<2x32xf32>
    %58 = vector.extract_strided_slice %57 {offsets = [0, 0], sizes = [1, 32], strides = [1, 1]} : vector<2x32xf32> to vector<1x32xf32>
    %59 = vector.extract_strided_slice %57 {offsets = [1, 0], sizes = [1, 32], strides = [1, 1]} : vector<2x32xf32> to vector<1x32xf32>
    %60 = arith.addf %58, %59 : vector<1x32xf32>
    %cst_18 = arith.constant 3.200000e+01 : f32
    %61 = vector.broadcast %cst_18 : f32 to vector<1x32xf32>
    %62 = arith.divf %60, %61 : vector<1x32xf32>
    %cst_19 = arith.constant 9.99999974E-6 : f32
    %63 = vector.broadcast %cst_19 : f32 to vector<1x32xf32>
    %64 = arith.addf %62, %63 : vector<1x32xf32>
    %65 = math.rsqrt %64 : vector<1x32xf32>
    %c0_20 = arith.constant 0 : index
    %c0_21 = arith.constant 0 : index
    %66 = vector.load %arg3[%c0_20, %c0_21] : memref<32x512xbf16, #tpu.memory_space<vmem>>, vector<32x512xbf16>
    %67 = arith.truncf %65 : vector<1x32xf32> to vector<1x32xbf16>
    %68 = arith.extf %67 : vector<1x32xbf16> to vector<1x32xf32>
    %69 = arith.subf %65, %68 : vector<1x32xf32>
    %70 = arith.truncf %69 : vector<1x32xf32> to vector<1x32xbf16>
    %71 = tpu.concatenate %67, %70 in 0 : vector<1x32xbf16>, vector<1x32xbf16> -> vector<2x32xbf16>
    %cst_22 = arith.constant dense<0.000000e+00> : vector<2x512xf32>
    %72 = tpu.matmul %71, %66, %cst_22 {dimension_numbers = #tpu.dot_dimension_numbers<[1], [0], [0], [1], [0, 0, 1, 1], [], []>} : vector<2x32xbf16>, vector<32x512xbf16>, vector<2x512xf32> -> vector<2x512xf32>
    %73 = vector.extract_strided_slice %72 {offsets = [0, 0], sizes = [1, 512], strides = [1, 1]} : vector<2x512xf32> to vector<1x512xf32>
    %74 = vector.extract_strided_slice %72 {offsets = [1, 0], sizes = [1, 512], strides = [1, 1]} : vector<2x512xf32> to vector<1x512xf32>
    %75 = arith.addf %73, %74 : vector<1x512xf32>
    %c1 = arith.constant 1 : index
    %c0_23 = arith.constant 0 : index
    %76 = vector.load %arg6[%c1, %c0_23] : memref<10x1024xf32, #tpu.memory_space<vmem>>, vector<1x512xf32>
    %77 = arith.mulf %75, %76 : vector<1x512xf32>
    %78 = vector.broadcast %77 : vector<1x512xf32> to vector<2x512xf32>
    %79 = arith.mulf %47, %78 : vector<2x512xf32>
    %c2 = arith.constant 2 : index
    %c0_24 = arith.constant 0 : index
    %80 = vector.load %arg6[%c2, %c0_24] : memref<10x1024xf32, #tpu.memory_space<vmem>>, vector<1x512xf32>
    %81 = vector.broadcast %80 : vector<1x512xf32> to vector<2x512xf32>
    %82 = arith.addf %79, %81 : vector<2x512xf32>
    %cst_25 = arith.constant 0.000000e+00 : f32
    %83 = vector.broadcast %cst_25 : f32 to vector<2x512xf32>
    %84 = arith.maximumf %82, %83 : vector<2x512xf32>
    %c0_26 = arith.constant 0 : index
    %c0_27 = arith.constant 0 : index
    %85 = vector.load %arg4[%c0_26, %c0_27] : memref<512x64xbf16, #tpu.memory_space<vmem>>, vector<512x64xbf16>
    %86 = arith.truncf %84 : vector<2x512xf32> to vector<2x512xbf16>
    %87 = arith.extf %86 : vector<2x512xbf16> to vector<2x512xf32>
    %88 = arith.subf %84, %87 : vector<2x512xf32>
    %89 = arith.truncf %88 : vector<2x512xf32> to vector<2x512xbf16>
    %90 = tpu.concatenate %86, %89 in 0 : vector<2x512xbf16>, vector<2x512xbf16> -> vector<4x512xbf16>
    %cst_28 = arith.constant dense<0.000000e+00> : vector<4x64xf32>
    %91 = tpu.matmul %90, %85, %cst_28 {dimension_numbers = #tpu.dot_dimension_numbers<[1], [0], [0], [1], [0, 0, 1, 1], [], []>} : vector<4x512xbf16>, vector<512x64xbf16>, vector<4x64xf32> -> vector<4x64xf32>
    %92 = vector.extract_strided_slice %91 {offsets = [0, 0], sizes = [2, 64], strides = [1, 1]} : vector<4x64xf32> to vector<2x64xf32>
    %93 = vector.extract_strided_slice %91 {offsets = [2, 0], sizes = [2, 64], strides = [1, 1]} : vector<4x64xf32> to vector<2x64xf32>
    %94 = arith.addf %92, %93 : vector<2x64xf32>
    %c3 = arith.constant 3 : index
    %c0_29 = arith.constant 0 : index
    %95 = vector.load %arg6[%c3, %c0_29] : memref<10x1024xf32, #tpu.memory_space<vmem>>, vector<1x64xf32>
    %96 = vector.broadcast %95 : vector<1x64xf32> to vector<2x64xf32>
    %97 = arith.addf %94, %96 : vector<2x64xf32>
    %98 = vector.extract_strided_slice %97 {offsets = [0, 0], sizes = [2, 32], strides = [1, 1]} : vector<2x64xf32> to vector<2x32xf32>
    %99 = vector.extract_strided_slice %97 {offsets = [0, 32], sizes = [2, 32], strides = [1, 1]} : vector<2x64xf32> to vector<2x32xf32>
    %100 = arith.negf %99 : vector<2x32xf32>
    %101 = math.exp %100 : vector<2x32xf32>
    %cst_30 = arith.constant 1.000000e+00 : f32
    %102 = vector.broadcast %cst_30 : f32 to vector<2x32xf32>
    %103 = arith.addf %102, %101 : vector<2x32xf32>
    %104 = arith.divf %102, %103 : vector<2x32xf32>
    %105 = arith.mulf %98, %104 : vector<2x32xf32>
    %cst_31 = arith.constant dense<0.000000e+00> : vector<32xf32>
    %106 = vector.multi_reduction <add>, %105, %cst_31 [0] : vector<2x32xf32> to vector<32xf32>
    %107 = vector.shape_cast %106 : vector<32xf32> to vector<1x32xf32>
    %cst_32 = arith.constant 2.000000e+00 : f32
    %108 = vector.broadcast %cst_32 : f32 to vector<1x32xf32>
    %109 = arith.divf %107, %108 : vector<1x32xf32>
    %110 = vector.broadcast %109 : vector<1x32xf32> to vector<2x32xf32>
    %111 = arith.subf %105, %110 : vector<2x32xf32>
    %112 = arith.mulf %111, %111 : vector<2x32xf32>
    %cst_33 = arith.constant dense<0.000000e+00> : vector<32xf32>
    %113 = vector.multi_reduction <add>, %112, %cst_33 [0] : vector<2x32xf32> to vector<32xf32>
    %114 = vector.shape_cast %113 : vector<32xf32> to vector<1x32xf32>
    %cst_34 = arith.constant 2.000000e+00 : f32
    %115 = vector.broadcast %cst_34 : f32 to vector<1x32xf32>
    %116 = arith.divf %114, %115 : vector<1x32xf32>
    %cst_35 = arith.constant 9.99999974E-6 : f32
    %117 = vector.broadcast %cst_35 : f32 to vector<1x32xf32>
    %118 = arith.addf %116, %117 : vector<1x32xf32>
    %119 = math.rsqrt %118 : vector<1x32xf32>
    %120 = vector.broadcast %119 : vector<1x32xf32> to vector<2x32xf32>
    %121 = arith.mulf %111, %120 : vector<2x32xf32>
    %c4 = arith.constant 4 : index
    %c0_36 = arith.constant 0 : index
    %122 = vector.load %arg6[%c4, %c0_36] : memref<10x1024xf32, #tpu.memory_space<vmem>>, vector<1x32xf32>
    %123 = vector.broadcast %122 : vector<1x32xf32> to vector<2x32xf32>
    %124 = arith.mulf %121, %123 : vector<2x32xf32>
    %c5 = arith.constant 5 : index
    %c0_37 = arith.constant 0 : index
    %125 = vector.load %arg6[%c5, %c0_37] : memref<10x1024xf32, #tpu.memory_space<vmem>>, vector<1x32xf32>
    %126 = vector.broadcast %125 : vector<1x32xf32> to vector<2x32xf32>
    %127 = arith.addf %124, %126 : vector<2x32xf32>
    %cst_38 = arith.constant 0.000000e+00 : f32
    %128 = vector.broadcast %cst_38 : f32 to vector<2x32xf32>
    %129 = arith.maximumf %127, %128 : vector<2x32xf32>
    %c0_39 = arith.constant 0 : index
    %c0_40 = arith.constant 0 : index
    %130 = vector.load %arg5[%c0_39, %c0_40] : memref<32x1024xbf16, #tpu.memory_space<vmem>>, vector<32x1024xbf16>
    %131 = arith.truncf %129 : vector<2x32xf32> to vector<2x32xbf16>
    %132 = arith.extf %131 : vector<2x32xbf16> to vector<2x32xf32>
    %133 = arith.subf %129, %132 : vector<2x32xf32>
    %134 = arith.truncf %133 : vector<2x32xf32> to vector<2x32xbf16>
    %135 = tpu.concatenate %131, %134 in 0 : vector<2x32xbf16>, vector<2x32xbf16> -> vector<4x32xbf16>
    %cst_41 = arith.constant dense<0.000000e+00> : vector<4x1024xf32>
    %136 = tpu.matmul %135, %130, %cst_41 {dimension_numbers = #tpu.dot_dimension_numbers<[1], [0], [0], [1], [0, 0, 1, 1], [], []>} : vector<4x32xbf16>, vector<32x1024xbf16>, vector<4x1024xf32> -> vector<4x1024xf32>
    %137 = vector.extract_strided_slice %136 {offsets = [0, 0], sizes = [2, 1024], strides = [1, 1]} : vector<4x1024xf32> to vector<2x1024xf32>
    %138 = vector.extract_strided_slice %136 {offsets = [2, 0], sizes = [2, 1024], strides = [1, 1]} : vector<4x1024xf32> to vector<2x1024xf32>
    %139 = arith.addf %137, %138 : vector<2x1024xf32>
    %c6 = arith.constant 6 : index
    %c0_42 = arith.constant 0 : index
    %140 = vector.load %arg6[%c6, %c0_42] : memref<10x1024xf32, #tpu.memory_space<vmem>>, vector<1x1024xf32>
    %141 = vector.broadcast %140 : vector<1x1024xf32> to vector<2x1024xf32>
    %142 = arith.addf %139, %141 : vector<2x1024xf32>
    %cst_43 = arith.constant dense<0.000000e+00> : vector<1024xf32>
    %143 = vector.multi_reduction <add>, %142, %cst_43 [0] : vector<2x1024xf32> to vector<1024xf32>
    %144 = vector.shape_cast %143 : vector<1024xf32> to vector<1x1024xf32>
    %cst_44 = arith.constant 2.000000e+00 : f32
    %145 = vector.broadcast %cst_44 : f32 to vector<1x1024xf32>
    %146 = arith.divf %144, %145 : vector<1x1024xf32>
    %147 = vector.broadcast %146 : vector<1x1024xf32> to vector<2x1024xf32>
    %148 = arith.subf %142, %147 : vector<2x1024xf32>
    %149 = arith.mulf %148, %148 : vector<2x1024xf32>
    %cst_45 = arith.constant dense<0.000000e+00> : vector<1024xf32>
    %150 = vector.multi_reduction <add>, %149, %cst_45 [0] : vector<2x1024xf32> to vector<1024xf32>
    %151 = vector.shape_cast %150 : vector<1024xf32> to vector<1x1024xf32>
    %cst_46 = arith.constant 2.000000e+00 : f32
    %152 = vector.broadcast %cst_46 : f32 to vector<1x1024xf32>
    %153 = arith.divf %151, %152 : vector<1x1024xf32>
    %cst_47 = arith.constant 9.99999974E-6 : f32
    %154 = vector.broadcast %cst_47 : f32 to vector<1x1024xf32>
    %155 = arith.addf %153, %154 : vector<1x1024xf32>
    %156 = math.rsqrt %155 : vector<1x1024xf32>
    %157 = vector.broadcast %156 : vector<1x1024xf32> to vector<2x1024xf32>
    %158 = arith.mulf %148, %157 : vector<2x1024xf32>
    %c7 = arith.constant 7 : index
    %c0_48 = arith.constant 0 : index
    %159 = vector.load %arg6[%c7, %c0_48] : memref<10x1024xf32, #tpu.memory_space<vmem>>, vector<1x1024xf32>
    %160 = vector.broadcast %159 : vector<1x1024xf32> to vector<2x1024xf32>
    %161 = arith.mulf %158, %160 : vector<2x1024xf32>
    %c8 = arith.constant 8 : index
    %c0_49 = arith.constant 0 : index
    %162 = vector.load %arg6[%c8, %c0_49] : memref<10x1024xf32, #tpu.memory_space<vmem>>, vector<1x1024xf32>
    %163 = vector.broadcast %162 : vector<1x1024xf32> to vector<2x1024xf32>
    %164 = arith.addf %161, %163 : vector<2x1024xf32>
    %cst_50 = arith.constant 0.000000e+00 : f32
    %165 = vector.broadcast %cst_50 : f32 to vector<2x1024xf32>
    %166 = arith.maximumf %164, %165 : vector<2x1024xf32>
    tpu.wait_dma2 semaphore(%arg10 : memref<!tpu.dma_semaphore, #tpu.memory_space<semaphore_mem>>) src(%arg7 : memref<1024x128xbf16, #tpu.memory_space<any>>) dst(%arg9 : memref<1024x128xbf16, #tpu.memory_space<vmem>>)
    %c0_51 = arith.constant 0 : index
    %c0_52 = arith.constant 0 : index
    %167 = vector.load %arg9[%c0_51, %c0_52] : memref<1024x128xbf16, #tpu.memory_space<vmem>>, vector<1024x128xbf16>
    %168 = arith.truncf %166 : vector<2x1024xf32> to vector<2x1024xbf16>
    %169 = arith.extf %168 : vector<2x1024xbf16> to vector<2x1024xf32>
    %170 = arith.subf %166, %169 : vector<2x1024xf32>
    %171 = arith.truncf %170 : vector<2x1024xf32> to vector<2x1024xbf16>
    %172 = tpu.concatenate %168, %171 in 0 : vector<2x1024xbf16>, vector<2x1024xbf16> -> vector<4x1024xbf16>
    %cst_53 = arith.constant dense<0.000000e+00> : vector<4x128xf32>
    %173 = tpu.matmul %172, %167, %cst_53 {dimension_numbers = #tpu.dot_dimension_numbers<[1], [0], [0], [1], [0, 0, 1, 1], [], []>} : vector<4x1024xbf16>, vector<1024x128xbf16>, vector<4x128xf32> -> vector<4x128xf32>
    %174 = vector.extract_strided_slice %173 {offsets = [0, 0], sizes = [2, 128], strides = [1, 1]} : vector<4x128xf32> to vector<2x128xf32>
    %175 = vector.extract_strided_slice %173 {offsets = [2, 0], sizes = [2, 128], strides = [1, 1]} : vector<4x128xf32> to vector<2x128xf32>
    %176 = arith.addf %174, %175 : vector<2x128xf32>
    %c9 = arith.constant 9 : index
    %c0_54 = arith.constant 0 : index
    %177 = vector.load %arg6[%c9, %c0_54] : memref<10x1024xf32, #tpu.memory_space<vmem>>, vector<1x128xf32>
    %178 = vector.broadcast %177 : vector<1x128xf32> to vector<2x128xf32>
    %179 = arith.addf %176, %178 : vector<2x128xf32>
    %c0_55 = arith.constant 0 : index
    %c0_56 = arith.constant 0 : index
    %180 = vector.load %arg8[%c0_55, %c0_56] : memref<2x128xf32, #tpu.memory_space<vmem>>, vector<2x128xf32>
    tpu.vector_store %arg8[%c0_55, %c0_56], %179 {strides = array<i32>} : memref<2x128xf32, #tpu.memory_space<vmem>>, vector<2x128xf32>,
    return
  }
}

</mosaic_0001>

<llo_original>
// kernel: fused_forward.1
$region0: #{fused_forward.1}
  #allocation0 [shape = 'u32[]', space=smem, size = 0x4, offset = 0x4, fixed_abs, tag = 'smem constant byte address 0x4 - core index']
  #allocation1 [shape = 'u32[72,128]{1,0:T(1,128)}', space=vmem, size = 0x9000, scoped, tag = 'internal scratch']
  #allocation2 [shape = 'bf16[1024,128]{1,0:T(8,128)(2,1)}', space=vmem, size = 0x40000, scoped, tag = 'scratch operand']
  #allocation3 [shape = 's32[1]{0}', space=sflag, size = 0x4, scoped, tag = 'scratch operand']
  #allocation10 [shape = 's32[]', space=sflag, size = 0x4, offset = 0, fixed_abs, tag = 'sflag constant byte address 0x0 - dummy sync flag']
  %s0 = inlined_call_operand.vmem [shape: f32[2,32], index: 0, kind: input, shape index: {}]
  %s1 = inlined_call_operand.vmem [shape: bf16[32,1024], index: 1, kind: input, shape index: {}]
  %s2 = inlined_call_operand.vmem [shape: bf16[512,32], index: 2, kind: input, shape index: {}]
  %s3 = inlined_call_operand.vmem [shape: bf16[32,512], index: 3, kind: input, shape index: {}]
  %s4 = inlined_call_operand.vmem [shape: bf16[512,64], index: 4, kind: input, shape index: {}]
  %s5 = inlined_call_operand.hbm [shape: bf16[32,1024], index: 5, kind: input, shape index: {}]
  %s6 = inlined_call_operand.hbm [shape: f32[10,1024], index: 6, kind: input, shape index: {}]
  %s7 = inlined_call_operand.vmem [shape: bf16[1024,128], index: 7, kind: input, shape index: {}]
  %s8 = inlined_call_operand.hbm [shape: f32[2,128], index: 8, kind: output, shape index: {}]
  %s9 = sld [smem:[#allocation0]]
  $region65: #{fused_forward.1} parent=0
    _
  %s11 = ssub.s32 1, %s9
  %s12 = scalar_select 0, %s11, %s9
  $region1: #{fused_forward.1} parent=0
    #allocation4 [shape = 'u8[65536]{0}', space=vmem, size = 0x10000, scoped, tag = 'input window, operand 5, single buffered']
    #allocation5 [shape = 's32[1]{0}', space=sflag, size = 0x4, scoped, tag = 'scoped memory for fused_forward.1']
    #allocation6 [shape = 's32[1]{0}', space=sflag, size = 0x4, scoped, tag = 'scoped memory for fused_forward.1']
    #allocation7 [shape = 'u8[65536]{0}', space=vmem, size = 0x10000, scoped, tag = 'input window, operand 6, single buffered']
    #allocation8 [shape = 's32[1]{0}', space=sflag, size = 0x4, scoped, tag = 'scoped memory for fused_forward.1']
    #allocation9 [shape = 'u8[1024]{0}', space=vmem, size = 0x400, scoped, tag = 'output window, operand 0, single buffered']
    %13 = vsyncpa [#allocation5], 0
    %14 = vsyncpa [#allocation8], 0
    %15 = vsyncpa [#allocation6], 0
    // Predicated region
    $region2: #{fused_forward.1} parent=1 // pred_check
      _
    $region3: #{fused_forward.1} parent=1 // pred_check_branch
      %17 = sbr.rel (0) target = $region5
    $region4: #{fused_forward.1} parent=1 // pred_region
      _
    $region5: #{fused_forward.1} parent=1 // pred_fallthru
      _
    // Predicated region
    $region6: #{fused_forward.1} parent=1 // pred_check
      _
    $region7: #{fused_forward.1} parent=1 // pred_check_branch
      %19 = sbr.rel (0) target = $region9
    $region8: #{fused_forward.1} parent=1 // pred_region
      _
    $region9: #{fused_forward.1} parent=1 // pred_fallthru
      _
    // Predicated region
    $region10: #{fused_forward.1} parent=1 // pred_check
      _
    $region11: #{fused_forward.1} parent=1 // pred_check_branch
      %21 = sbr.rel (0) target = $region13
    $region12: #{fused_forward.1} parent=1 // pred_region
      _
    $region13: #{fused_forward.1} parent=1 // pred_fallthru
      _
    // Predicated region
    $region14: #{fused_forward.1} parent=1 // pred_check
      _
    $region15: #{fused_forward.1} parent=1 // pred_check_branch
      %23 = sbr.rel (0) target = $region17
    $region16: #{fused_forward.1} parent=1 // pred_region
      _
    $region17: #{fused_forward.1} parent=1 // pred_fallthru
      _
    // Predicated region
    $region18: #{fused_forward.1} parent=1 // pred_check
      _
    $region19: #{fused_forward.1} parent=1 // pred_check_branch
      %25 = sbr.rel (0) target = $region21
    $region20: #{fused_forward.1} parent=1 // pred_region
      _
    $region21: #{fused_forward.1} parent=1 // pred_fallthru
      _
    // Predicated region
    $region22: #{fused_forward.1} parent=1 // pred_check
      _
    $region23: #{fused_forward.1} parent=1 // pred_check_branch
      %27 = sbr.rel (0) target = $region25
    $region24: #{fused_forward.1} parent=1 // pred_region
      %29 = vsyncadd [#allocation5], 0
      %s30 = sshll.u32 %s5, 4
      %s31 = int_to_ptr.hbm [resolvable:$true] %s30
      %s32 = sshll.u32 [#allocation4], 4
      %s33 = int_to_ptr.vmem [resolvable:$true] %s32
      %38 = dma.hbm_to_vmem [thread:$0]  %s31, 2048, %s33, [#allocation5], 512, 512, 32
    $region25: #{fused_forward.1} parent=1 // pred_fallthru
      _
    // Predicated region
    $region26: #{fused_forward.1} parent=1 // pred_check
      _
    $region27: #{fused_forward.1} parent=1 // pred_check_branch
      %40 = sbr.rel (0) target = $region29
    $region28: #{fused_forward.1} parent=1 // pred_region
      %42 = vsyncadd [#allocation8], 0
      %s43 = sshll.u32 %s6, 4
      %s44 = int_to_ptr.hbm [resolvable:$true] %s43
      %s45 = sshll.u32 [#allocation7], 4
      %s46 = int_to_ptr.vmem [resolvable:$true] %s45
      %51 = dma.hbm_to_vmem [thread:$0]  %s44, 2048, %s46, [#allocation8], 1024, 1024, 64
    $region29: #{fused_forward.1} parent=1 // pred_fallthru
      _
    // Predicated region
    $region30: #{fused_forward.1} parent=1 // pred_check
      _
    $region31: #{fused_forward.1} parent=1 // pred_check_branch
      %53 = sbr.rel (0) target = $region33
    $region32: #{fused_forward.1} parent=1 // pred_region
      %55 = dma.done [#allocation5], 2048
    $region33: #{fused_forward.1} parent=1 // pred_fallthru
      _
    // Predicated region
    $region34: #{fused_forward.1} parent=1 // pred_check
      _
    $region35: #{fused_forward.1} parent=1 // pred_check_branch
      %57 = sbr.rel (0) target = $region37
    $region36: #{fused_forward.1} parent=1 // pred_region
      %59 = dma.done [#allocation8], 2048
    $region37: #{fused_forward.1} parent=1 // pred_fallthru
      _
    // Predicated region
    $region38: #{fused_forward.1} parent=1 // pred_check
      _
    $region39: #{fused_forward.1} parent=1 // pred_check_branch
      %62 = sbr.rel (0) target = $region41
    $region40: #{fused_forward.1} parent=1 // pred_region
      loop: start=0, step=1, limit=1
      $region42: #{fused_forward.1} parent=40 // loop_pre_header
        _
      $region43: #{fused_forward.1} parent=40 // loop_header
        %s64 = sphi 0, %s68
        %p65 = scmp.ge.s32.totalorder %s64, 1
        %s69 = sphi %s7, %s7
        %s70 = sphi [#allocation2], [#allocation2]
      $region44: #{fused_forward.1} parent=40 // loop_header_branch
        %67 = sbr.rel (%p65) target = $region48
      $region45: #{fused_forward.1} parent=40 // loop_body
        %v71 = vld [vmem:[%s69] sm:$0xff]
        %72 = vst [vmem:[%s70] sm:$0xff] %v71
        %v73 = vld [vmem:[%s69 + $0x8] sm:$0xff]
        %74 = vst [vmem:[%s70 + $0x8] sm:$0xff] %v73
        %v75 = vld [vmem:[%s69 + $0x10] sm:$0xff]
        %76 = vst [vmem:[%s70 + $0x10] sm:$0xff] %v75
        %v77 = vld [vmem:[%s69 + $0x18] sm:$0xff]
        %78 = vst [vmem:[%s70 + $0x18] sm:$0xff] %v77
        %v79 = vld [vmem:[%s69 + $0x20] sm:$0xff]
        %80 = vst [vmem:[%s70 + $0x20] sm:$0xff] %v79
        %v81 = vld [vmem:[%s69 + $0x28] sm:$0xff]
        %82 = vst [vmem:[%s70 + $0x28] sm:$0xff] %v81
        %v83 = vld [vmem:[%s69 + $0x30] sm:$0xff]
        %84 = vst [vmem:[%s70 + $0x30] sm:$0xff] %v83
        %v85 = vld [vmem:[%s69 + $0x38] sm:$0xff]
        %86 = vst [vmem:[%s70 + $0x38] sm:$0xff] %v85
        %v87 = vld [vmem:[%s69 + $0x40] sm:$0xff]
        %88 = vst [vmem:[%s70 + $0x40] sm:$0xff] %v87
        %v89 = vld [vmem:[%s69 + $0x48] sm:$0xff]
        %90 = vst [vmem:[%s70 + $0x48] sm:$0xff] %v89
        %v91 = vld [vmem:[%s69 + $0x50] sm:$0xff]
        %92 = vst [vmem:[%s70 + $0x50] sm:$0xff] %v91
        %v93 = vld [vmem:[%s69 + $0x58] sm:$0xff]
        %94 = vst [vmem:[%s70 + $0x58] sm:$0xff] %v93
        %v95 = vld [vmem:[%s69 + $0x60] sm:$0xff]
        %96 = vst [vmem:[%s70 + $0x60] sm:$0xff] %v95
        %v97 = vld [vmem:[%s69 + $0x68] sm:$0xff]
        %98 = vst [vmem:[%s70 + $0x68] sm:$0xff] %v97
        %v99 = vld [vmem:[%s69 + $0x70] sm:$0xff]
        %100 = vst [vmem:[%s70 + $0x70] sm:$0xff] %v99
        %v101 = vld [vmem:[%s69 + $0x78] sm:$0xff]
        %102 = vst [vmem:[%s70 + $0x78] sm:$0xff] %v101
        %v103 = vld [vmem:[%s69 + $0x80] sm:$0xff]
        %104 = vst [vmem:[%s70 + $0x80] sm:$0xff] %v103
        %v105 = vld [vmem:[%s69 + $0x88] sm:$0xff]
        %106 = vst [vmem:[%s70 + $0x88] sm:$0xff] %v105
        %v107 = vld [vmem:[%s69 + $0x90] sm:$0xff]
        %108 = vst [vmem:[%s70 + $0x90] sm:$0xff] %v107
        %v109 = vld [vmem:[%s69 + $0x98] sm:$0xff]
        %110 = vst [vmem:[%s70 + $0x98] sm:$0xff] %v109
        %v111 = vld [vmem:[%s69 + $0xa0] sm:$0xff]
        %112 = vst [vmem:[%s70 + $0xa0] sm:$0xff] %v111
        %v113 = vld [vmem:[%s69 + $0xa8] sm:$0xff]
        %114 = vst [vmem:[%s70 + $0xa8] sm:$0xff] %v113
        %v115 = vld [vmem:[%s69 + $0xb0] sm:$0xff]
        %116 = vst [vmem:[%s70 + $0xb0] sm:$0xff] %v115
        %v117 = vld [vmem:[%s69 + $0xb8] sm:$0xff]
        %118 = vst [vmem:[%s70 + $0xb8] sm:$0xff] %v117
        %v119 = vld [vmem:[%s69 + $0xc0] sm:$0xff]
        %120 = vst [vmem:[%s70 + $0xc0] sm:$0xff] %v119
        %v121 = vld [vmem:[%s69 + $0xc8] sm:$0xff]
        %122 = vst [vmem:[%s70 + $0xc8] sm:$0xff] %v121
        %v123 = vld [vmem:[%s69 + $0xd0] sm:$0xff]
        %124 = vst [vmem:[%s70 + $0xd0] sm:$0xff] %v123
        %v125 = vld [vmem:[%s69 + $0xd8] sm:$0xff]
        %126 = vst [vmem:[%s70 + $0xd8] sm:$0xff] %v125
        %v127 = vld [vmem:[%s69 + $0xe0] sm:$0xff]
        %128 = vst [vmem:[%s70 + $0xe0] sm:$0xff] %v127
        %v129 = vld [vmem:[%s69 + $0xe8] sm:$0xff]
        %130 = vst [vmem:[%s70 + $0xe8] sm:$0xff] %v129
        %v131 = vld [vmem:[%s69 + $0xf0] sm:$0xff]
        %132 = vst [vmem:[%s70 + $0xf0] sm:$0xff] %v131
        %v133 = vld [vmem:[%s69 + $0xf8] sm:$0xff]
        %134 = vst [vmem:[%s70 + $0xf8] sm:$0xff] %v133
        %v135 = vld [vmem:[%s69 + $0x100] sm:$0xff]
        %136 = vst [vmem:[%s70 + $0x100] sm:$0xff] %v135
        %v137 = vld [vmem:[%s69 + $0x108] sm:$0xff]
        %138 = vst [vmem:[%s70 + $0x108] sm:$0xff] %v137
        %v139 = vld [vmem:[%s69 + $0x110] sm:$0xff]
        %140 = vst [vmem:[%s70 + $0x110] sm:$0xff] %v139
        %v141 = vld [vmem:[%s69 + $0x118] sm:$0xff]
        %142 = vst [vmem:[%s70 + $0x118] sm:$0xff] %v141
        %v143 = vld [vmem:[%s69 + $0x120] sm:$0xff]
        %144 = vst [vmem:[%s70 + $0x120] sm:$0xff] %v143
        %v145 = vld [vmem:[%s69 + $0x128] sm:$0xff]
        %146 = vst [vmem:[%s70 + $0x128] sm:$0xff] %v145
        %v147 = vld [vmem:[%s69 + $0x130] sm:$0xff]
        %148 = vst [vmem:[%s70 + $0x130] sm:$0xff] %v147
        %v149 = vld [vmem:[%s69 + $0x138] sm:$0xff]
        %150 = vst [vmem:[%s70 + $0x138] sm:$0xff] %v149
        %v151 = vld [vmem:[%s69 + $0x140] sm:$0xff]
        %152 = vst [vmem:[%s70 + $0x140] sm:$0xff] %v151
        %v153 = vld [vmem:[%s69 + $0x148] sm:$0xff]
        %154 = vst [vmem:[%s70 + $0x148] sm:$0xff] %v153
        %v155 = vld [vmem:[%s69 + $0x150] sm:$0xff]
        %156 = vst [vmem:[%s70 + $0x150] sm:$0xff] %v155
        %v157 = vld [vmem:[%s69 + $0x158] sm:$0xff]
        %158 = vst [vmem:[%s70 + $0x158] sm:$0xff] %v157
        %v159 = vld [vmem:[%s69 + $0x160] sm:$0xff]
        %160 = vst [vmem:[%s70 + $0x160] sm:$0xff] %v159
        %v161 = vld [vmem:[%s69 + $0x168] sm:$0xff]
        %162 = vst [vmem:[%s70 + $0x168] sm:$0xff] %v161
        %v163 = vld [vmem:[%s69 + $0x170] sm:$0xff]
        %164 = vst [vmem:[%s70 + $0x170] sm:$0xff] %v163
        %v165 = vld [vmem:[%s69 + $0x178] sm:$0xff]
        %166 = vst [vmem:[%s70 + $0x178] sm:$0xff] %v165
        %v167 = vld [vmem:[%s69 + $0x180] sm:$0xff]
        %168 = vst [vmem:[%s70 + $0x180] sm:$0xff] %v167
        %v169 = vld [vmem:[%s69 + $0x188] sm:$0xff]
        %170 = vst [vmem:[%s70 + $0x188] sm:$0xff] %v169
        %v171 = vld [vmem:[%s69 + $0x190] sm:$0xff]
        %172 = vst [vmem:[%s70 + $0x190] sm:$0xff] %v171
        %v173 = vld [vmem:[%s69 + $0x198] sm:$0xff]
        %174 = vst [vmem:[%s70 + $0x198] sm:$0xff] %v173
        %v175 = vld [vmem:[%s69 + $0x1a0] sm:$0xff]
        %176 = vst [vmem:[%s70 + $0x1a0] sm:$0xff] %v175
        %v177 = vld [vmem:[%s69 + $0x1a8] sm:$0xff]
        %178 = vst [vmem:[%s70 + $0x1a8] sm:$0xff] %v177
        %v179 = vld [vmem:[%s69 + $0x1b0] sm:$0xff]
        %180 = vst [vmem:[%s70 + $0x1b0] sm:$0xff] %v179
        %v181 = vld [vmem:[%s69 + $0x1b8] sm:$0xff]
        %182 = vst [vmem:[%s70 + $0x1b8] sm:$0xff] %v181
        %v183 = vld [vmem:[%s69 + $0x1c0] sm:$0xff]
        %184 = vst [vmem:[%s70 + $0x1c0] sm:$0xff] %v183
        %v185 = vld [vmem:[%s69 + $0x1c8] sm:$0xff]
        %186 = vst [vmem:[%s70 + $0x1c8] sm:$0xff] %v185
        %v187 = vld [vmem:[%s69 + $0x1d0] sm:$0xff]
        %188 = vst [vmem:[%s70 + $0x1d0] sm:$0xff] %v187
        %v189 = vld [vmem:[%s69 + $0x1d8] sm:$0xff]
        %190 = vst [vmem:[%s70 + $0x1d8] sm:$0xff] %v189
        %v191 = vld [vmem:[%s69 + $0x1e0] sm:$0xff]
        %192 = vst [vmem:[%s70 + $0x1e0] sm:$0xff] %v191
        %v193 = vld [vmem:[%s69 + $0x1e8] sm:$0xff]
        %194 = vst [vmem:[%s70 + $0x1e8] sm:$0xff] %v193
        %v195 = vld [vmem:[%s69 + $0x1f0] sm:$0xff]
        %196 = vst [vmem:[%s70 + $0x1f0] sm:$0xff] %v195
        %v197 = vld [vmem:[%s69 + $0x1f8] sm:$0xff]
        %198 = vst [vmem:[%s70 + $0x1f8] sm:$0xff] %v197
      $region46: #{fused_forward.1} parent=40 // loop_footer
        %s68 = sadd.s32 1, %s64
      $region47: #{fused_forward.1} parent=40 // loop_footer_branch
        %63 = sbr.rel target = $region43
      $region48: #{fused_forward.1} parent=40 // loop_exit
        _
    $region41: #{fused_forward.1} parent=1 // pred_fallthru
      _
    // Predicated region
    $region49: #{fused_forward.1} parent=1 // pred_check
      _
    $region50: #{fused_forward.1} parent=1 // pred_check_branch
      %200 = sbr.rel target = $region52
    $region51: #{fused_forward.1} parent=1 // pred_region
      _
    $region52: #{fused_forward.1} parent=1 // pred_fallthru
      _
    // Predicated region
    $region53: #{fused_forward.1} parent=1 // pred_check
      _
    $region54: #{fused_forward.1} parent=1 // pred_check_branch
      %203 = sbr.rel (0) target = $region56
    $region55: #{fused_forward.1} parent=1 // pred_region
      %204 = vsyncadd [#allocation3], 8192
    $region56: #{fused_forward.1} parent=1 // pred_fallthru
      _
    %v205 = vld [vmem:[%s0] sm:$0x3]
    %v206 = vld [vmem:[%s1] sm:$0xff]
    %v207 = vld [vmem:[%s1 + $0x8] sm:$0xff]
    %v208 = vld [vmem:[%s1 + $0x10] sm:$0xff]
    %v209 = vld [vmem:[%s1 + $0x18] sm:$0xff]
    %v210 = vld [vmem:[%s1 + $0x20] sm:$0xff]
    %v211 = vld [vmem:[%s1 + $0x28] sm:$0xff]
    %v212 = vld [vmem:[%s1 + $0x30] sm:$0xff]
    %v213 = vld [vmem:[%s1 + $0x38] sm:$0xff]
    %v214 = vld [vmem:[%s1 + $0x40] sm:$0xff]
    %v215 = vld [vmem:[%s1 + $0x48] sm:$0xff]
    %v216 = vld [vmem:[%s1 + $0x50] sm:$0xff]
    %v217 = vld [vmem:[%s1 + $0x58] sm:$0xff]
    %v218 = vld [vmem:[%s1 + $0x60] sm:$0xff]
    %v219 = vld [vmem:[%s1 + $0x68] sm:$0xff]
    %v220 = vld [vmem:[%s1 + $0x70] sm:$0xff]
    %v221 = vld [vmem:[%s1 + $0x78] sm:$0xff]
    %v222 = vpack.c.bf16 %v205, %v205
    %v223 = vunpack.c.l.bf16 %v222
    %v224 = vsub.f32 %v205, %v223
    %v225 = vpack.c.bf16 %v224, %v224
    %v227 = vunpack.c.l.b16 %v225
    %v228 = vpack.c.b16 %v227, %v227
    %v229 = vrot.slane %v228, 7
    %vm230 = vcmask 1040384
    %v233 = vsel %vm230, %v222, %v229
    %v250 = vunpack.c.l.b16 %v206
    %v251 = vunpack.c.h.b16 %v206
    %v252 = vunpack.c.l.b16 %v207
    %v253 = vunpack.c.h.b16 %v207
    %v254 = vunpack.c.l.b16 %v208
    %v255 = vunpack.c.h.b16 %v208
    %v256 = vunpack.c.l.b16 %v209
    %v257 = vunpack.c.h.b16 %v209
    %v258 = vunpack.c.l.b16 %v210
    %v259 = vunpack.c.h.b16 %v210
    %v260 = vunpack.c.l.b16 %v211
    %v261 = vunpack.c.h.b16 %v211
    %v262 = vunpack.c.l.b16 %v212
    %v263 = vunpack.c.h.b16 %v212
    %v264 = vunpack.c.l.b16 %v213
    %v265 = vunpack.c.h.b16 %v213
    %v266 = vunpack.c.l.b16 %v214
    %v267 = vunpack.c.h.b16 %v214
    %v268 = vunpack.c.l.b16 %v215
    %v269 = vunpack.c.h.b16 %v215
    %v270 = vunpack.c.l.b16 %v216
    %v271 = vunpack.c.h.b16 %v216
    %v272 = vunpack.c.l.b16 %v217
    %v273 = vunpack.c.h.b16 %v217
    %v274 = vunpack.c.l.b16 %v218
    %v275 = vunpack.c.h.b16 %v218
    %v276 = vunpack.c.l.b16 %v219
    %v277 = vunpack.c.h.b16 %v219
    %v278 = vunpack.c.l.b16 %v220
    %v279 = vunpack.c.h.b16 %v220
    %v280 = vunpack.c.l.b16 %v221
    %v281 = vunpack.c.h.b16 %v221
    %v282 = vpack.c.b16 %v258, %v250
    %v283 = vpack.c.b16 %v259, %v251
    %v284 = vpack.c.b16 %v260, %v252
    %v285 = vpack.c.b16 %v261, %v253
    %v286 = vpack.c.b16 %v262, %v254
    %v287 = vpack.c.b16 %v263, %v255
    %v288 = vpack.c.b16 %v264, %v256
    %v289 = vpack.c.b16 %v265, %v257
    %v290 = vpack.c.b16 %v274, %v266
    %v291 = vpack.c.b16 %v275, %v267
    %v292 = vpack.c.b16 %v276, %v268
    %v293 = vpack.c.b16 %v277, %v269
    %v294 = vpack.c.b16 %v278, %v270
    %v295 = vpack.c.b16 %v279, %v271
    %v296 = vpack.c.b16 %v280, %v272
    %v297 = vpack.c.b16 %v281, %v273
    %vm314 = vcmask 261120
    %v315 = vsel %vm314, %v233, 0
    %317 = vmatpush.bf16.msra.mxu0 0
    %318 = vmatpush.bf16.msra.mxu0 0
    %319 = vmatpush.bf16.msra.mxu0 0
    %320 = vmatpush.bf16.msra.mxu0 0
    %321 = vmatpush.bf16.msra.mxu0 0
    %322 = vmatpush.bf16.msra.mxu0 0
    %323 = vmatpush.bf16.msra.mxu0 %v290
    %324 = vmatpush.bf16.msra.mxu0 %v282
    %325 = vmatmul.bf16.gmra.mxu0 %v315
    %v326 = vpop.f32.mrf.mxu0
    %v327 = vadd.f32 0.0, %v326
    %v328 = vpop.f32.mrf.mxu0
    %329 = vdwg.mxu0
    %330 = vmatpush.bf16.msra.mxu0 0
    %331 = vmatpush.bf16.msra.mxu0 0
    %332 = vmatpush.bf16.msra.mxu0 0
    %333 = vmatpush.bf16.msra.mxu0 0
    %334 = vmatpush.bf16.msra.mxu0 0
    %335 = vmatpush.bf16.msra.mxu0 0
    %336 = vmatpush.bf16.msra.mxu0 %v291
    %337 = vmatpush.bf16.msra.mxu0 %v283
    %338 = vmatmul.bf16.gmra.mxu0 %v315
    %v339 = vpop.f32.mrf.mxu0
    %v340 = vadd.f32 0.0, %v339
    %v341 = vpop.f32.mrf.mxu0
    %342 = vdwg.mxu0
    %343 = vmatpush.bf16.msra.mxu0 0
    %344 = vmatpush.bf16.msra.mxu0 0
    %345 = vmatpush.bf16.msra.mxu0 0
    %346 = vmatpush.bf16.msra.mxu0 0
    %347 = vmatpush.bf16.msra.mxu0 0
    %348 = vmatpush.bf16.msra.mxu0 0
    %349 = vmatpush.bf16.msra.mxu0 %v292
    %350 = vmatpush.bf16.msra.mxu0 %v284
    %351 = vmatmul.bf16.gmra.mxu0 %v315
    %v352 = vpop.f32.mrf.mxu0
    %v353 = vadd.f32 0.0, %v352
    %v354 = vpop.f32.mrf.mxu0
    %355 = vdwg.mxu0
    %356 = vmatpush.bf16.msra.mxu0 0
    %357 = vmatpush.bf16.msra.mxu0 0
    %358 = vmatpush.bf16.msra.mxu0 0
    %359 = vmatpush.bf16.msra.mxu0 0
    %360 = vmatpush.bf16.msra.mxu0 0
    %361 = vmatpush.bf16.msra.mxu0 0
    %362 = vmatpush.bf16.msra.mxu0 %v293
    %363 = vmatpush.bf16.msra.mxu0 %v285
    %364 = vmatmul.bf16.gmra.mxu0 %v315
    %v365 = vpop.f32.mrf.mxu0
    %v366 = vadd.f32 0.0, %v365
    %v367 = vpop.f32.mrf.mxu0
    %368 = vdwg.mxu0
    %369 = vmatpush.bf16.msra.mxu0 0
    %370 = vmatpush.bf16.msra.mxu0 0
    %371 = vmatpush.bf16.msra.mxu0 0
    %372 = vmatpush.bf16.msra.mxu0 0
    %373 = vmatpush.bf16.msra.mxu0 0
    %374 = vmatpush.bf16.msra.mxu0 0
    %375 = vmatpush.bf16.msra.mxu0 %v294
    %376 = vmatpush.bf16.msra.mxu0 %v286
    %377 = vmatmul.bf16.gmra.mxu0 %v315
    %v378 = vpop.f32.mrf.mxu0
    %v379 = vadd.f32 0.0, %v378
    %v380 = vpop.f32.mrf.mxu0
    %381 = vdwg.mxu0
    %382 = vmatpush.bf16.msra.mxu0 0
    %383 = vmatpush.bf16.msra.mxu0 0
    %384 = vmatpush.bf16.msra.mxu0 0
    %385 = vmatpush.bf16.msra.mxu0 0
    %386 = vmatpush.bf16.msra.mxu0 0
    %387 = vmatpush.bf16.msra.mxu0 0
    %388 = vmatpush.bf16.msra.mxu0 %v295
    %389 = vmatpush.bf16.msra.mxu0 %v287
    %390 = vmatmul.bf16.gmra.mxu0 %v315
    %v391 = vpop.f32.mrf.mxu0
    %v392 = vadd.f32 0.0, %v391
    %v393 = vpop.f32.mrf.mxu0
    %394 = vdwg.mxu0
    %395 = vmatpush.bf16.msra.mxu0 0
    %396 = vmatpush.bf16.msra.mxu0 0
    %397 = vmatpush.bf16.msra.mxu0 0
    %398 = vmatpush.bf16.msra.mxu0 0
    %399 = vmatpush.bf16.msra.mxu0 0
    %400 = vmatpush.bf16.msra.mxu0 0
    %401 = vmatpush.bf16.msra.mxu0 %v296
    %402 = vmatpush.bf16.msra.mxu0 %v288
    %403 = vmatmul.bf16.gmra.mxu0 %v315
    %v404 = vpop.f32.mrf.mxu0
    %v405 = vadd.f32 0.0, %v404
    %v406 = vpop.f32.mrf.mxu0
    %407 = vdwg.mxu0
    %408 = vmatpush.bf16.msra.mxu0 0
    %409 = vmatpush.bf16.msra.mxu0 0
    %410 = vmatpush.bf16.msra.mxu0 0
    %411 = vmatpush.bf16.msra.mxu0 0
    %412 = vmatpush.bf16.msra.mxu0 0
    %413 = vmatpush.bf16.msra.mxu0 0
    %414 = vmatpush.bf16.msra.mxu0 %v297
    %415 = vmatpush.bf16.msra.mxu0 %v289
    %416 = vmatmul.bf16.gmra.mxu0 %v315
    %v417 = vpop.f32.mrf.mxu0
    %v418 = vadd.f32 0.0, %v417
    %v419 = vpop.f32.mrf.mxu0
    %420 = vdwg.mxu0
    %v429 = vrot.slane %v327, 2
    %v430 = vrot.slane %v340, 2
    %v431 = vrot.slane %v353, 2
    %v432 = vrot.slane %v366, 2
    %v433 = vrot.slane %v379, 2
    %v434 = vrot.slane %v392, 2
    %v435 = vrot.slane %v405, 2
    %v436 = vrot.slane %v418, 2
    %v445 = vadd.f32 %v327, %v429
    %v446 = vadd.f32 %v340, %v430
    %v447 = vadd.f32 %v353, %v431
    %v448 = vadd.f32 %v366, %v432
    %v449 = vadd.f32 %v379, %v433
    %v450 = vadd.f32 %v392, %v434
    %v451 = vadd.f32 %v405, %v435
    %v452 = vadd.f32 %v418, %v436
    %v453 = vld [vmem:[#allocation7] ss:$8 sm:$0xf]
    %v454 = vld [vmem:[#allocation7] ss:$8 sm:$0xf0]
    %v455 = vor.u32 %v453, %v454
    %v457 = vperm.slane %v455, 0
    %v458 = vperm.slane %v455, 1
    %v459 = vperm.slane %v455, 2
    %v460 = vperm.slane %v455, 3
    %v461 = vperm.slane %v455, 4
    %v462 = vperm.slane %v455, 5
    %v463 = vperm.slane %v455, 6
    %v464 = vperm.slane %v455, 7
    %v473 = vadd.f32 %v445, %v457
    %v474 = vadd.f32 %v446, %v458
    %v475 = vadd.f32 %v447, %v459
    %v476 = vadd.f32 %v448, %v460
    %v477 = vadd.f32 %v449, %v461
    %v478 = vadd.f32 %v450, %v462
    %v479 = vadd.f32 %v451, %v463
    %v480 = vadd.f32 %v452, %v464
    %v481 = vxor.u32 %v477, 2147483648
    %v482 = vxor.u32 %v478, 2147483648
    %v483 = vxor.u32 %v479, 2147483648
    %v484 = vxor.u32 %v480, 2147483648
    %v485 = vmul.f32 %v481, 1.442695
    %v486 = vpow.pop %v485
    %v487 = vmul.f32 %v482, 1.442695
    %v488 = vpow.pop %v487
    %v489 = vmul.f32 %v483, 1.442695
    %v490 = vpow.pop %v489
    %v491 = vmul.f32 %v484, 1.442695
    %v492 = vpow.pop %v491
    %v493 = vadd.f32 %v486, 1.0
    %v494 = vadd.f32 %v488, 1.0
    %v495 = vadd.f32 %v490, 1.0
    %v496 = vadd.f32 %v492, 1.0
    %v497 = vrcp.pop %v493
    %v498 = vmul.f32 %v493, %v497
    %v499 = vsub.f32 1.0, %v498
    %v500 = vmul.f32 %v497, %v499
    %v501 = vadd.f32 %v497, %v500
    %vm502 = vweird.f32 %v493
    %vm503 = vweird.f32 %v497
    %vm504 = vmor %vm502, %vm503
    %v505 = vsel %vm504, %v497, %v501
    %v506 = vand.u32 2147483647, %v493
    %vm507 = vcmp.eq.f32.partialorder %v506, 8.507059e+37
    %v508 = vand.u32 %v493, 2147483648
    %v509 = vor.u32 1.1754944e-38, %v508
    %v510 = vsel %vm507, %v509, %v505
    %v511 = vmul.f32 1.0, %v510
    %v512 = vrcp.pop %v494
    %v513 = vmul.f32 %v494, %v512
    %v514 = vsub.f32 1.0, %v513
    %v515 = vmul.f32 %v512, %v514
    %v516 = vadd.f32 %v512, %v515
    %vm517 = vweird.f32 %v494
    %vm518 = vweird.f32 %v512
    %vm519 = vmor %vm517, %vm518
    %v520 = vsel %vm519, %v512, %v516
    %v521 = vand.u32 2147483647, %v494
    %vm522 = vcmp.eq.f32.partialorder %v521, 8.507059e+37
    %v523 = vand.u32 %v494, 2147483648
    %v524 = vor.u32 1.1754944e-38, %v523
    %v525 = vsel %vm522, %v524, %v520
    %v526 = vmul.f32 1.0, %v525
    %v527 = vrcp.pop %v495
    %v528 = vmul.f32 %v495, %v527
    %v529 = vsub.f32 1.0, %v528
    %v530 = vmul.f32 %v527, %v529
    %v531 = vadd.f32 %v527, %v530
    %vm532 = vweird.f32 %v495
    %vm533 = vweird.f32 %v527
    %vm534 = vmor %vm532, %vm533
    %v535 = vsel %vm534, %v527, %v531
    %v536 = vand.u32 2147483647, %v495
    %vm537 = vcmp.eq.f32.partialorder %v536, 8.507059e+37
    %v538 = vand.u32 %v495, 2147483648
    %v539 = vor.u32 1.1754944e-38, %v538
    %v540 = vsel %vm537, %v539, %v535
    %v541 = vmul.f32 1.0, %v540
    %v542 = vrcp.pop %v496
    %v543 = vmul.f32 %v496, %v542
    %v544 = vsub.f32 1.0, %v543
    %v545 = vmul.f32 %v542, %v544
    %v546 = vadd.f32 %v542, %v545
    %vm547 = vweird.f32 %v496
    %vm548 = vweird.f32 %v542
    %vm549 = vmor %vm547, %vm548
    %v550 = vsel %vm549, %v542, %v546
    %v551 = vand.u32 2147483647, %v496
    %vm552 = vcmp.eq.f32.partialorder %v551, 8.507059e+37
    %v553 = vand.u32 %v496, 2147483648
    %v554 = vor.u32 1.1754944e-38, %v553
    %v555 = vsel %vm552, %v554, %v550
    %v556 = vmul.f32 1.0, %v555
    %v557 = vmul.f32 %v473, %v511
    %v558 = vmul.f32 %v474, %v526
    %v559 = vmul.f32 %v475, %v541
    %v560 = vmul.f32 %v476, %v556
    %vm561 = vcmask 1041408
    %v562 = vsel %vm561, %v557, 0.0
    %v563 = vrot.slane %v562, 4
    %v564 = vadd.f32 %v562, %v563
    %v565 = vrot.slane %v564, 2
    %v566 = vadd.f32 %v564, %v565
    %v567 = vrot.slane %v566, 1
    %v568 = vadd.f32 %v566, %v567
    %v569 = vsel %vm561, %v558, 0.0
    %v570 = vrot.slane %v569, 4
    %v571 = vadd.f32 %v569, %v570
    %v572 = vrot.slane %v571, 2
    %v573 = vadd.f32 %v571, %v572
    %v574 = vrot.slane %v573, 1
    %v575 = vadd.f32 %v573, %v574
    %v576 = vsel %vm561, %v559, 0.0
    %v577 = vrot.slane %v576, 4
    %v578 = vadd.f32 %v576, %v577
    %v579 = vrot.slane %v578, 2
    %v580 = vadd.f32 %v578, %v579
    %v581 = vrot.slane %v580, 1
    %v582 = vadd.f32 %v580, %v581
    %v583 = vsel %vm561, %v560, 0.0
    %v584 = vrot.slane %v583, 4
    %v585 = vadd.f32 %v583, %v584
    %v586 = vrot.slane %v585, 2
    %v587 = vadd.f32 %v585, %v586
    %v588 = vrot.slane %v587, 1
    %v589 = vadd.f32 %v587, %v588
    %v590 = vld [vmem:[%s2] sm:$0xf]
    %v591 = vld [vmem:[%s2 + $0x4] sm:$0xf]
    %v592 = vld [vmem:[%s2 + $0x8] sm:$0xf]
    %v593 = vld [vmem:[%s2 + $0xc] sm:$0xf]
    %v594 = vld [vmem:[%s2 + $0x10] sm:$0xf]
    %v595 = vld [vmem:[%s2 + $0x14] sm:$0xf]
    %v596 = vld [vmem:[%s2 + $0x18] sm:$0xf]
    %v597 = vld [vmem:[%s2 + $0x1c] sm:$0xf]
    %v598 = vld [vmem:[%s2 + $0x20] sm:$0xf]
    %v599 = vld [vmem:[%s2 + $0x24] sm:$0xf]
    %v600 = vld [vmem:[%s2 + $0x28] sm:$0xf]
    %v601 = vld [vmem:[%s2 + $0x2c] sm:$0xf]
    %v602 = vld [vmem:[%s2 + $0x30] sm:$0xf]
    %v603 = vld [vmem:[%s2 + $0x34] sm:$0xf]
    %v604 = vld [vmem:[%s2 + $0x38] sm:$0xf]
    %v605 = vld [vmem:[%s2 + $0x3c] sm:$0xf]
    %v606 = vld [vmem:[%s2 + $0x40] sm:$0xf]
    %v607 = vld [vmem:[%s2 + $0x44] sm:$0xf]
    %v608 = vld [vmem:[%s2 + $0x48] sm:$0xf]
    %v609 = vld [vmem:[%s2 + $0x4c] sm:$0xf]
    %v610 = vld [vmem:[%s2 + $0x50] sm:$0xf]
    %v611 = vld [vmem:[%s2 + $0x54] sm:$0xf]
    %v612 = vld [vmem:[%s2 + $0x58] sm:$0xf]
    %v613 = vld [vmem:[%s2 + $0x5c] sm:$0xf]
    %v614 = vld [vmem:[%s2 + $0x60] sm:$0xf]
    %v615 = vld [vmem:[%s2 + $0x64] sm:$0xf]
    %v616 = vld [vmem:[%s2 + $0x68] sm:$0xf]
    %v617 = vld [vmem:[%s2 + $0x6c] sm:$0xf]
    %v618 = vld [vmem:[%s2 + $0x70] sm:$0xf]
    %v619 = vld [vmem:[%s2 + $0x74] sm:$0xf]
    %v620 = vld [vmem:[%s2 + $0x78] sm:$0xf]
    %v621 = vld [vmem:[%s2 + $0x7c] sm:$0xf]
    %v622 = vld [vmem:[%s2 + $0x80] sm:$0xf]
    %v623 = vld [vmem:[%s2 + $0x84] sm:$0xf]
    %v624 = vld [vmem:[%s2 + $0x88] sm:$0xf]
    %v625 = vld [vmem:[%s2 + $0x8c] sm:$0xf]
    %v626 = vld [vmem:[%s2 + $0x90] sm:$0xf]
    %v627 = vld [vmem:[%s2 + $0x94] sm:$0xf]
    %v628 = vld [vmem:[%s2 + $0x98] sm:$0xf]
    %v629 = vld [vmem:[%s2 + $0x9c] sm:$0xf]
    %v630 = vld [vmem:[%s2 + $0xa0] sm:$0xf]
    %v631 = vld [vmem:[%s2 + $0xa4] sm:$0xf]
    %v632 = vld [vmem:[%s2 + $0xa8] sm:$0xf]
    %v633 = vld [vmem:[%s2 + $0xac] sm:$0xf]
    %v634 = vld [vmem:[%s2 + $0xb0] sm:$0xf]
    %v635 = vld [vmem:[%s2 + $0xb4] sm:$0xf]
    %v636 = vld [vmem:[%s2 + $0xb8] sm:$0xf]
    %v637 = vld [vmem:[%s2 + $0xbc] sm:$0xf]
    %v638 = vld [vmem:[%s2 + $0xc0] sm:$0xf]
    %v639 = vld [vmem:[%s2 + $0xc4] sm:$0xf]
    %v640 = vld [vmem:[%s2 + $0xc8] sm:$0xf]
    %v641 = vld [vmem:[%s2 + $0xcc] sm:$0xf]
    %v642 = vld [vmem:[%s2 + $0xd0] sm:$0xf]
    %v643 = vld [vmem:[%s2 + $0xd4] sm:$0xf]
    %v644 = vld [vmem:[%s2 + $0xd8] sm:$0xf]
    %v645 = vld [vmem:[%s2 + $0xdc] sm:$0xf]
    %v646 = vld [vmem:[%s2 + $0xe0] sm:$0xf]
    %v647 = vld [vmem:[%s2 + $0xe4] sm:$0xf]
    %v648 = vld [vmem:[%s2 + $0xe8] sm:$0xf]
    %v649 = vld [vmem:[%s2 + $0xec] sm:$0xf]
    %v650 = vld [vmem:[%s2 + $0xf0] sm:$0xf]
    %v651 = vld [vmem:[%s2 + $0xf4] sm:$0xf]
    %v652 = vld [vmem:[%s2 + $0xf8] sm:$0xf]
    %v653 = vld [vmem:[%s2 + $0xfc] sm:$0xf]
    %v654 = vpack.c.bf16 %v575, %v568
    %v655 = vpack.c.bf16 %v589, %v582
    %v656 = vunpack.c.l.bf16 %v654
    %v657 = vunpack.c.h.bf16 %v654
    %v658 = vunpack.c.l.bf16 %v655
    %v659 = vunpack.c.h.bf16 %v655
    %v660 = vsub.f32 %v568, %v656
    %v661 = vsub.f32 %v575, %v657
    %v662 = vsub.f32 %v582, %v658
    %v663 = vsub.f32 %v589, %v659
    %v664 = vpack.c.bf16 %v661, %v660
    %v665 = vpack.c.bf16 %v663, %v662
    %v668 = vperm.slane %v654, 0
    %v669 = vperm.slane %v654, 4
    %v670 = vperm.slane %v655, 0
    %v671 = vperm.slane %v655, 4
    %v678 = vperm.slane %v664, 0
    %v679 = vperm.slane %v664, 4
    %v680 = vperm.slane %v665, 0
    %v681 = vperm.slane %v665, 4
    %vm686 = vcmask 1040384
    %vm687 = vsmask.f32 256
    %vm688 = vmand %vm686, %vm687
    %v689 = vsel %vm688, %v668, %v678
    %v690 = vsel %vm688, %v669, %v679
    %v691 = vsel %vm688, %v670, %v680
    %v692 = vsel %vm688, %v671, %v681
    %v757 = vunpack.c.l.b16 %v590
    %v758 = vunpack.c.l.b16 %v591
    %v759 = vunpack.c.l.b16 %v592
    %v760 = vunpack.c.l.b16 %v593
    %v761 = vunpack.c.l.b16 %v594
    %v762 = vunpack.c.l.b16 %v595
    %v763 = vunpack.c.l.b16 %v596
    %v764 = vunpack.c.l.b16 %v597
    %v765 = vunpack.c.l.b16 %v598
    %v766 = vunpack.c.l.b16 %v599
    %v767 = vunpack.c.l.b16 %v600
    %v768 = vunpack.c.l.b16 %v601
    %v769 = vunpack.c.l.b16 %v602
    %v770 = vunpack.c.l.b16 %v603
    %v771 = vunpack.c.l.b16 %v604
    %v772 = vunpack.c.l.b16 %v605
    %v773 = vunpack.c.l.b16 %v606
    %v774 = vunpack.c.l.b16 %v607
    %v775 = vunpack.c.l.b16 %v608
    %v776 = vunpack.c.l.b16 %v609
    %v777 = vunpack.c.l.b16 %v610
    %v778 = vunpack.c.l.b16 %v611
    %v779 = vunpack.c.l.b16 %v612
    %v780 = vunpack.c.l.b16 %v613
    %v781 = vunpack.c.l.b16 %v614
    %v782 = vunpack.c.l.b16 %v615
    %v783 = vunpack.c.l.b16 %v616
    %v784 = vunpack.c.l.b16 %v617
    %v785 = vunpack.c.l.b16 %v618
    %v786 = vunpack.c.l.b16 %v619
    %v787 = vunpack.c.l.b16 %v620
    %v788 = vunpack.c.l.b16 %v621
    %v789 = vunpack.c.l.b16 %v622
    %v790 = vunpack.c.l.b16 %v623
    %v791 = vunpack.c.l.b16 %v624
    %v792 = vunpack.c.l.b16 %v625
    %v793 = vunpack.c.l.b16 %v626
    %v794 = vunpack.c.l.b16 %v627
    %v795 = vunpack.c.l.b16 %v628
    %v796 = vunpack.c.l.b16 %v629
    %v797 = vunpack.c.l.b16 %v630
    %v798 = vunpack.c.l.b16 %v631
    %v799 = vunpack.c.l.b16 %v632
    %v800 = vunpack.c.l.b16 %v633
    %v801 = vunpack.c.l.b16 %v634
    %v802 = vunpack.c.l.b16 %v635
    %v803 = vunpack.c.l.b16 %v636
    %v804 = vunpack.c.l.b16 %v637
    %v805 = vunpack.c.l.b16 %v638
    %v806 = vunpack.c.l.b16 %v639
    %v807 = vunpack.c.l.b16 %v640
    %v808 = vunpack.c.l.b16 %v641
    %v809 = vunpack.c.l.b16 %v642
    %v810 = vunpack.c.l.b16 %v643
    %v811 = vunpack.c.l.b16 %v644
    %v812 = vunpack.c.l.b16 %v645
    %v813 = vunpack.c.l.b16 %v646
    %v814 = vunpack.c.l.b16 %v647
    %v815 = vunpack.c.l.b16 %v648
    %v816 = vunpack.c.l.b16 %v649
    %v817 = vunpack.c.l.b16 %v650
    %v818 = vunpack.c.l.b16 %v651
    %v819 = vunpack.c.l.b16 %v652
    %v820 = vunpack.c.l.b16 %v653
    %v821 = vpack.c.b16 %v758, %v757
    %v822 = vpack.c.b16 %v760, %v759
    %v823 = vpack.c.b16 %v762, %v761
    %v824 = vpack.c.b16 %v764, %v763
    %v825 = vpack.c.b16 %v766, %v765
    %v826 = vpack.c.b16 %v768, %v767
    %v827 = vpack.c.b16 %v770, %v769
    %v828 = vpack.c.b16 %v772, %v771
    %v829 = vpack.c.b16 %v774, %v773
    %v830 = vpack.c.b16 %v776, %v775
    %v831 = vpack.c.b16 %v778, %v777
    %v832 = vpack.c.b16 %v780, %v779
    %v833 = vpack.c.b16 %v782, %v781
    %v834 = vpack.c.b16 %v784, %v783
    %v835 = vpack.c.b16 %v786, %v785
    %v836 = vpack.c.b16 %v788, %v787
    %v837 = vpack.c.b16 %v790, %v789
    %v838 = vpack.c.b16 %v792, %v791
    %v839 = vpack.c.b16 %v794, %v793
    %v840 = vpack.c.b16 %v796, %v795
    %v841 = vpack.c.b16 %v798, %v797
    %v842 = vpack.c.b16 %v800, %v799
    %v843 = vpack.c.b16 %v802, %v801
    %v844 = vpack.c.b16 %v804, %v803
    %v845 = vpack.c.b16 %v806, %v805
    %v846 = vpack.c.b16 %v808, %v807
    %v847 = vpack.c.b16 %v810, %v809
    %v848 = vpack.c.b16 %v812, %v811
    %v849 = vpack.c.b16 %v814, %v813
    %v850 = vpack.c.b16 %v816, %v815
    %v851 = vpack.c.b16 %v818, %v817
    %v852 = vpack.c.b16 %v820, %v819
    %885 = vmatpush.bf16.msra.mxu0 %v828
    %886 = vmatpush.bf16.msra.mxu0 %v827
    %887 = vmatpush.bf16.msra.mxu0 %v826
    %888 = vmatpush.bf16.msra.mxu0 %v825
    %889 = vmatpush.bf16.msra.mxu0 %v824
    %890 = vmatpush.bf16.msra.mxu0 %v823
    %891 = vmatpush.bf16.msra.mxu0 %v822
    %892 = vmatpush.bf16.msra.mxu0 %v821
    %893 = vmatmul.bf16.gmra.mxu0 %v689
    %v894 = vpop.f32.mrf.mxu0
    %v895 = vadd.f32 0.0, %v894
    %v896 = vpop.f32.mrf.mxu0
    %897 = vdwg.mxu0
    %898 = vmatpush.bf16.msra.mxu0 %v836
    %899 = vmatpush.bf16.msra.mxu0 %v835
    %900 = vmatpush.bf16.msra.mxu0 %v834
    %901 = vmatpush.bf16.msra.mxu0 %v833
    %902 = vmatpush.bf16.msra.mxu0 %v832
    %903 = vmatpush.bf16.msra.mxu0 %v831
    %904 = vmatpush.bf16.msra.mxu0 %v830
    %905 = vmatpush.bf16.msra.mxu0 %v829
    %906 = vmatmul.bf16.gmra.mxu0 %v690
    %v907 = vpop.f32.mrf.mxu0
    %v908 = vadd.f32 %v895, %v907
    %v909 = vpop.f32.mrf.mxu0
    %910 = vdwg.mxu0
    %911 = vmatpush.bf16.msra.mxu0 %v844
    %912 = vmatpush.bf16.msra.mxu0 %v843
    %913 = vmatpush.bf16.msra.mxu0 %v842
    %914 = vmatpush.bf16.msra.mxu0 %v841
    %915 = vmatpush.bf16.msra.mxu0 %v840
    %916 = vmatpush.bf16.msra.mxu0 %v839
    %917 = vmatpush.bf16.msra.mxu0 %v838
    %918 = vmatpush.bf16.msra.mxu0 %v837
    %919 = vmatmul.bf16.gmra.mxu0 %v691
    %v920 = vpop.f32.mrf.mxu0
    %v921 = vadd.f32 %v908, %v920
    %v922 = vpop.f32.mrf.mxu0
    %923 = vdwg.mxu0
    %924 = vmatpush.bf16.msra.mxu0 %v852
    %925 = vmatpush.bf16.msra.mxu0 %v851
    %926 = vmatpush.bf16.msra.mxu0 %v850
    %927 = vmatpush.bf16.msra.mxu0 %v849
    %928 = vmatpush.bf16.msra.mxu0 %v848
    %929 = vmatpush.bf16.msra.mxu0 %v847
    %930 = vmatpush.bf16.msra.mxu0 %v846
    %931 = vmatpush.bf16.msra.mxu0 %v845
    %932 = vmatmul.bf16.gmra.mxu0 %v692
    %v933 = vpop.f32.mrf.mxu0
    %v934 = vadd.f32 %v921, %v933
    %v935 = vpop.f32.mrf.mxu0
    %936 = vdwg.mxu0
    %v938 = vrot.slane %v934, 1
    %v940 = vadd.f32 %v934, %v938
    %v941 = vrcp.pop 32.0
    %v942 = vmul.f32 32.0, %v941
    %v943 = vsub.f32 1.0, %v942
    %v944 = vmul.f32 %v941, %v943
    %v945 = vadd.f32 %v941, %v944
    %vm946 = vweird.f32 %v941
    %v947 = vsel %vm946, %v941, %v945
    %v948 = vmul.f32 %v940, %v947
    %v949 = vld [vmem:[%s3] sm:$0xff]
    %v950 = vld [vmem:[%s3 + $0x8] sm:$0xff]
    %v951 = vld [vmem:[%s3 + $0x10] sm:$0xff]
    %v952 = vld [vmem:[%s3 + $0x18] sm:$0xff]
    %v953 = vld [vmem:[%s3 + $0x20] sm:$0xff]
    %v954 = vld [vmem:[%s3 + $0x28] sm:$0xff]
    %v955 = vld [vmem:[%s3 + $0x30] sm:$0xff]
    %v956 = vld [vmem:[%s3 + $0x38] sm:$0xff]
    %v957 = vpack.c.bf16 %v948, %v948
    %v958 = vunpack.c.l.bf16 %v957
    %v959 = vsub.f32 %v948, %v958
    %v960 = vpack.c.bf16 %v959, %v959
    %v962 = vunpack.c.l.b16 %v960
    %v963 = vpack.c.b16 %v962, %v962
    %v965 = vshll.u32 %v963, 16
    %v968 = vsel %vm688, %v957, %v965
    %v977 = vunpack.c.l.b16 %v949
    %v978 = vunpack.c.h.b16 %v949
    %v979 = vunpack.c.l.b16 %v950
    %v980 = vunpack.c.h.b16 %v950
    %v981 = vunpack.c.l.b16 %v951
    %v982 = vunpack.c.h.b16 %v951
    %v983 = vunpack.c.l.b16 %v952
    %v984 = vunpack.c.h.b16 %v952
    %v985 = vunpack.c.l.b16 %v953
    %v986 = vunpack.c.h.b16 %v953
    %v987 = vunpack.c.l.b16 %v954
    %v988 = vunpack.c.h.b16 %v954
    %v989 = vunpack.c.l.b16 %v955
    %v990 = vunpack.c.h.b16 %v955
    %v991 = vunpack.c.l.b16 %v956
    %v992 = vunpack.c.h.b16 %v956
    %v993 = vpack.c.b16 %v981, %v977
    %v994 = vpack.c.b16 %v982, %v978
    %v995 = vpack.c.b16 %v983, %v979
    %v996 = vpack.c.b16 %v984, %v980
    %v997 = vpack.c.b16 %v989, %v985
    %v998 = vpack.c.b16 %v990, %v986
    %v999 = vpack.c.b16 %v991, %v987
    %v1000 = vpack.c.b16 %v992, %v988
    %v1010 = vsel %vm314, %v968, 0
    %1012 = vmatpush.bf16.msra.mxu0 0
    %1013 = vmatpush.bf16.msra.mxu0 0
    %1014 = vmatpush.bf16.msra.mxu0 0
    %1015 = vmatpush.bf16.msra.mxu0 0
    %1016 = vmatpush.bf16.msra.mxu0 0
    %1017 = vmatpush.bf16.msra.mxu0 0
    %1018 = vmatpush.bf16.msra.mxu0 %v997
    %1019 = vmatpush.bf16.msra.mxu0 %v993
    %1020 = vmatmul.bf16.gmra.mxu0 %v1010
    %v1021 = vpop.f32.mrf.mxu0
    %v1022 = vadd.f32 0.0, %v1021
    %v1023 = vpop.f32.mrf.mxu0
    %1024 = vdwg.mxu0
    %1025 = vmatpush.bf16.msra.mxu0 0
    %1026 = vmatpush.bf16.msra.mxu0 0
    %1027 = vmatpush.bf16.msra.mxu0 0
    %1028 = vmatpush.bf16.msra.mxu0 0
    %1029 = vmatpush.bf16.msra.mxu0 0
    %1030 = vmatpush.bf16.msra.mxu0 0
    %1031 = vmatpush.bf16.msra.mxu0 %v998
    %1032 = vmatpush.bf16.msra.mxu0 %v994
    %1033 = vmatmul.bf16.gmra.mxu0 %v1010
    %v1034 = vpop.f32.mrf.mxu0
    %v1035 = vadd.f32 0.0, %v1034
    %v1036 = vpop.f32.mrf.mxu0
    %1037 = vdwg.mxu0
    %1038 = vmatpush.bf16.msra.mxu0 0
    %1039 = vmatpush.bf16.msra.mxu0 0
    %1040 = vmatpush.bf16.msra.mxu0 0
    %1041 = vmatpush.bf16.msra.mxu0 0
    %1042 = vmatpush.bf16.msra.mxu0 0
    %1043 = vmatpush.bf16.msra.mxu0 0
    %1044 = vmatpush.bf16.msra.mxu0 %v999
    %1045 = vmatpush.bf16.msra.mxu0 %v995
    %1046 = vmatmul.bf16.gmra.mxu0 %v1010
    %v1047 = vpop.f32.mrf.mxu0
    %v1048 = vadd.f32 0.0, %v1047
    %v1049 = vpop.f32.mrf.mxu0
    %1050 = vdwg.mxu0
    %1051 = vmatpush.bf16.msra.mxu0 0
    %1052 = vmatpush.bf16.msra.mxu0 0
    %1053 = vmatpush.bf16.msra.mxu0 0
    %1054 = vmatpush.bf16.msra.mxu0 0
    %1055 = vmatpush.bf16.msra.mxu0 0
    %1056 = vmatpush.bf16.msra.mxu0 0
    %1057 = vmatpush.bf16.msra.mxu0 %v1000
    %1058 = vmatpush.bf16.msra.mxu0 %v996
    %1059 = vmatmul.bf16.gmra.mxu0 %v1010
    %v1060 = vpop.f32.mrf.mxu0
    %v1061 = vadd.f32 0.0, %v1060
    %v1062 = vpop.f32.mrf.mxu0
    %1063 = vdwg.mxu0
    %v1068 = vrot.slane %v1022, 1
    %v1069 = vrot.slane %v1035, 1
    %v1070 = vrot.slane %v1048, 1
    %v1071 = vrot.slane %v1061, 1
    %v1076 = vadd.f32 %v1022, %v1068
    %v1077 = vadd.f32 %v1035, %v1069
    %v1078 = vadd.f32 %v1048, %v1070
    %v1079 = vadd.f32 %v1061, %v1071
    %v1080 = vperm.slane %v1076, 0
    %v1081 = vperm.slane %v1077, 0
    %v1082 = vperm.slane %v1078, 0
    %v1083 = vperm.slane %v1079, 0
    %v1084 = vsub.f32 %v557, %v1080
    %v1085 = vsub.f32 %v558, %v1081
    %v1086 = vsub.f32 %v559, %v1082
    %v1087 = vsub.f32 %v560, %v1083
    %v1088 = vmul.f32 %v1084, %v1084
    %v1089 = vmul.f32 %v1085, %v1085
    %v1090 = vmul.f32 %v1086, %v1086
    %v1091 = vmul.f32 %v1087, %v1087
    %v1092 = vsel %vm561, %v1088, 0.0
    %v1093 = vrot.slane %v1092, 4
    %v1094 = vadd.f32 %v1092, %v1093
    %v1095 = vrot.slane %v1094, 2
    %v1096 = vadd.f32 %v1094, %v1095
    %v1097 = vrot.slane %v1096, 1
    %v1098 = vadd.f32 %v1096, %v1097
    %v1099 = vsel %vm561, %v1089, 0.0
    %v1100 = vrot.slane %v1099, 4
    %v1101 = vadd.f32 %v1099, %v1100
    %v1102 = vrot.slane %v1101, 2
    %v1103 = vadd.f32 %v1101, %v1102
    %v1104 = vrot.slane %v1103, 1
    %v1105 = vadd.f32 %v1103, %v1104
    %v1106 = vsel %vm561, %v1090, 0.0
    %v1107 = vrot.slane %v1106, 4
    %v1108 = vadd.f32 %v1106, %v1107
    %v1109 = vrot.slane %v1108, 2
    %v1110 = vadd.f32 %v1108, %v1109
    %v1111 = vrot.slane %v1110, 1
    %v1112 = vadd.f32 %v1110, %v1111
    %v1113 = vsel %vm561, %v1091, 0.0
    %v1114 = vrot.slane %v1113, 4
    %v1115 = vadd.f32 %v1113, %v1114
    %v1116 = vrot.slane %v1115, 2
    %v1117 = vadd.f32 %v1115, %v1116
    %v1118 = vrot.slane %v1117, 1
    %v1119 = vadd.f32 %v1117, %v1118
    %v1120 = vpack.c.bf16 %v1105, %v1098
    %v1121 = vpack.c.bf16 %v1119, %v1112
    %v1122 = vunpack.c.l.bf16 %v1120
    %v1123 = vunpack.c.h.bf16 %v1120
    %v1124 = vunpack.c.l.bf16 %v1121
    %v1125 = vunpack.c.h.bf16 %v1121
    %v1126 = vsub.f32 %v1098, %v1122
    %v1127 = vsub.f32 %v1105, %v1123
    %v1128 = vsub.f32 %v1112, %v1124
    %v1129 = vsub.f32 %v1119, %v1125
    %v1130 = vpack.c.bf16 %v1127, %v1126
    %v1131 = vpack.c.bf16 %v1129, %v1128
    %v1134 = vperm.slane %v1120, 0
    %v1135 = vperm.slane %v1120, 4
    %v1136 = vperm.slane %v1121, 0
    %v1137 = vperm.slane %v1121, 4
    %v1144 = vperm.slane %v1130, 0
    %v1145 = vperm.slane %v1130, 4
    %v1146 = vperm.slane %v1131, 0
    %v1147 = vperm.slane %v1131, 4
    %v1152 = vsel %vm688, %v1134, %v1144
    %v1153 = vsel %vm688, %v1135, %v1145
    %v1154 = vsel %vm688, %v1136, %v1146
    %v1155 = vsel %vm688, %v1137, %v1147
    %1156 = vmatpush.bf16.msra.mxu0 %v828
    %1157 = vmatpush.bf16.msra.mxu0 %v827
    %1158 = vmatpush.bf16.msra.mxu0 %v826
    %1159 = vmatpush.bf16.msra.mxu0 %v825
    %1160 = vmatpush.bf16.msra.mxu0 %v824
    %1161 = vmatpush.bf16.msra.mxu0 %v823
    %1162 = vmatpush.bf16.msra.mxu0 %v822
    %1163 = vmatpush.bf16.msra.mxu0 %v821
    %1164 = vmatmul.bf16.gmra.mxu0 %v1152
    %v1165 = vpop.f32.mrf.mxu0
    %v1166 = vadd.f32 0.0, %v1165
    %v1167 = vpop.f32.mrf.mxu0
    %1168 = vdwg.mxu0
    %1169 = vmatpush.bf16.msra.mxu0 %v836
    %1170 = vmatpush.bf16.msra.mxu0 %v835
    %1171 = vmatpush.bf16.msra.mxu0 %v834
    %1172 = vmatpush.bf16.msra.mxu0 %v833
    %1173 = vmatpush.bf16.msra.mxu0 %v832
    %1174 = vmatpush.bf16.msra.mxu0 %v831
    %1175 = vmatpush.bf16.msra.mxu0 %v830
    %1176 = vmatpush.bf16.msra.mxu0 %v829
    %1177 = vmatmul.bf16.gmra.mxu0 %v1153
    %v1178 = vpop.f32.mrf.mxu0
    %v1179 = vadd.f32 %v1166, %v1178
    %v1180 = vpop.f32.mrf.mxu0
    %1181 = vdwg.mxu0
    %1182 = vmatpush.bf16.msra.mxu0 %v844
    %1183 = vmatpush.bf16.msra.mxu0 %v843
    %1184 = vmatpush.bf16.msra.mxu0 %v842
    %1185 = vmatpush.bf16.msra.mxu0 %v841
    %1186 = vmatpush.bf16.msra.mxu0 %v840
    %1187 = vmatpush.bf16.msra.mxu0 %v839
    %1188 = vmatpush.bf16.msra.mxu0 %v838
    %1189 = vmatpush.bf16.msra.mxu0 %v837
    %1190 = vmatmul.bf16.gmra.mxu0 %v1154
    %v1191 = vpop.f32.mrf.mxu0
    %v1192 = vadd.f32 %v1179, %v1191
    %v1193 = vpop.f32.mrf.mxu0
    %1194 = vdwg.mxu0
    %1195 = vmatpush.bf16.msra.mxu0 %v852
    %1196 = vmatpush.bf16.msra.mxu0 %v851
    %1197 = vmatpush.bf16.msra.mxu0 %v850
    %1198 = vmatpush.bf16.msra.mxu0 %v849
    %1199 = vmatpush.bf16.msra.mxu0 %v848
    %1200 = vmatpush.bf16.msra.mxu0 %v847
    %1201 = vmatpush.bf16.msra.mxu0 %v846
    %1202 = vmatpush.bf16.msra.mxu0 %v845
    %1203 = vmatmul.bf16.gmra.mxu0 %v1155
    %v1204 = vpop.f32.mrf.mxu0
    %v1205 = vadd.f32 %v1192, %v1204
    %v1206 = vpop.f32.mrf.mxu0
    %1207 = vdwg.mxu0
    %v1209 = vrot.slane %v1205, 1
    %v1211 = vadd.f32 %v1205, %v1209
    %v1212 = vmul.f32 %v1211, %v947
    %v1213 = vadd.f32 %v1212, 1e-05
    %v1214 = vrsqrt.pop %v1213
    %v1215 = vmul.f32 %v1214, %v1213
    %v1216 = vmul.f32 %v1215, %v1214
    %v1217 = vmul.f32 0.5, %v1216
    %v1218 = vsub.f32 1.5, %v1217
    %v1219 = vmul.f32 %v1214, %v1218
    %vm1220 = vweird.f32 %v1213
    %vm1221 = vweird.f32 %v1214
    %vm1222 = vmor %vm1220, %vm1221
    %v1223 = vsel %vm1222, %v1214, %v1219
    %v1224 = vpack.c.bf16 %v1223, %v1223
    %v1225 = vunpack.c.l.bf16 %v1224
    %v1226 = vsub.f32 %v1223, %v1225
    %v1227 = vpack.c.bf16 %v1226, %v1226
    %v1229 = vunpack.c.l.b16 %v1227
    %v1230 = vpack.c.b16 %v1229, %v1229
    %v1232 = vshll.u32 %v1230, 16
    %v1235 = vsel %vm688, %v1224, %v1232
    %v1237 = vsel %vm314, %v1235, 0
    %1239 = vmatpush.bf16.msra.mxu0 0
    %1240 = vmatpush.bf16.msra.mxu0 0
    %1241 = vmatpush.bf16.msra.mxu0 0
    %1242 = vmatpush.bf16.msra.mxu0 0
    %1243 = vmatpush.bf16.msra.mxu0 0
    %1244 = vmatpush.bf16.msra.mxu0 0
    %1245 = vmatpush.bf16.msra.mxu0 %v997
    %1246 = vmatpush.bf16.msra.mxu0 %v993
    %1247 = vmatmul.bf16.gmra.mxu0 %v1237
    %v1248 = vpop.f32.mrf.mxu0
    %v1249 = vadd.f32 0.0, %v1248
    %v1250 = vpop.f32.mrf.mxu0
    %1251 = vdwg.mxu0
    %1252 = vmatpush.bf16.msra.mxu0 0
    %1253 = vmatpush.bf16.msra.mxu0 0
    %1254 = vmatpush.bf16.msra.mxu0 0
    %1255 = vmatpush.bf16.msra.mxu0 0
    %1256 = vmatpush.bf16.msra.mxu0 0
    %1257 = vmatpush.bf16.msra.mxu0 0
    %1258 = vmatpush.bf16.msra.mxu0 %v998
    %1259 = vmatpush.bf16.msra.mxu0 %v994
    %1260 = vmatmul.bf16.gmra.mxu0 %v1237
    %v1261 = vpop.f32.mrf.mxu0
    %v1262 = vadd.f32 0.0, %v1261
    %v1263 = vpop.f32.mrf.mxu0
    %1264 = vdwg.mxu0
    %1265 = vmatpush.bf16.msra.mxu0 0
    %1266 = vmatpush.bf16.msra.mxu0 0
    %1267 = vmatpush.bf16.msra.mxu0 0
    %1268 = vmatpush.bf16.msra.mxu0 0
    %1269 = vmatpush.bf16.msra.mxu0 0
    %1270 = vmatpush.bf16.msra.mxu0 0
    %1271 = vmatpush.bf16.msra.mxu0 %v999
    %1272 = vmatpush.bf16.msra.mxu0 %v995
    %1273 = vmatmul.bf16.gmra.mxu0 %v1237
    %v1274 = vpop.f32.mrf.mxu0
    %v1275 = vadd.f32 0.0, %v1274
    %v1276 = vpop.f32.mrf.mxu0
    %1277 = vdwg.mxu0
    %1278 = vmatpush.bf16.msra.mxu0 0
    %1279 = vmatpush.bf16.msra.mxu0 0
    %1280 = vmatpush.bf16.msra.mxu0 0
    %1281 = vmatpush.bf16.msra.mxu0 0
    %1282 = vmatpush.bf16.msra.mxu0 0
    %1283 = vmatpush.bf16.msra.mxu0 0
    %1284 = vmatpush.bf16.msra.mxu0 %v1000
    %1285 = vmatpush.bf16.msra.mxu0 %v996
    %1286 = vmatmul.bf16.gmra.mxu0 %v1237
    %v1287 = vpop.f32.mrf.mxu0
    %v1288 = vadd.f32 0.0, %v1287
    %v1289 = vpop.f32.mrf.mxu0
    %1290 = vdwg.mxu0
    %v1295 = vrot.slane %v1249, 1
    %v1296 = vrot.slane %v1262, 1
    %v1297 = vrot.slane %v1275, 1
    %v1298 = vrot.slane %v1288, 1
    %v1303 = vadd.f32 %v1249, %v1295
    %v1304 = vadd.f32 %v1262, %v1296
    %v1305 = vadd.f32 %v1275, %v1297
    %v1306 = vadd.f32 %v1288, %v1298
    %s1307 = scalar_lea.vmem [#allocation7], 1
    %v1308 = vld [vmem:[%s1307] ss:$8 sm:$0xf]
    %v1310 = vperm.slane %v1308, 0
    %v1311 = vperm.slane %v1308, 1
    %v1312 = vperm.slane %v1308, 2
    %v1313 = vperm.slane %v1308, 3
    %v1318 = vmul.f32 %v1303, %v1310
    %v1319 = vmul.f32 %v1304, %v1311
    %v1320 = vmul.f32 %v1305, %v1312
    %v1321 = vmul.f32 %v1306, %v1313
    %v1322 = vperm.slane %v1318, 0
    %v1323 = vperm.slane %v1319, 0
    %v1324 = vperm.slane %v1320, 0
    %v1325 = vperm.slane %v1321, 0
    %v1326 = vmul.f32 %v1084, %v1322
    %v1327 = vmul.f32 %v1085, %v1323
    %v1328 = vmul.f32 %v1086, %v1324
    %v1329 = vmul.f32 %v1087, %v1325
    %s1330 = scalar_lea.vmem [#allocation7], 2
    %v1331 = vld [vmem:[%s1330] ss:$8 sm:$0xf]
    %v1333 = vperm.slane %v1331, 0
    %v1334 = vperm.slane %v1331, 1
    %v1335 = vperm.slane %v1331, 2
    %v1336 = vperm.slane %v1331, 3
    %v1341 = vadd.f32 %v1326, %v1333
    %v1342 = vadd.f32 %v1327, %v1334
    %v1343 = vadd.f32 %v1328, %v1335
    %v1344 = vadd.f32 %v1329, %v1336
    %v1345 = vmax.f32 %v1341, 0.0
    %v1346 = vmax.f32 %v1342, 0.0
    %v1347 = vmax.f32 %v1343, 0.0
    %v1348 = vmax.f32 %v1344, 0.0
    %v1349 = vld [vmem:[%s4] sm:$0xf]
    %v1350 = vld [vmem:[%s4 + $0x4] sm:$0xf]
    %v1351 = vld [vmem:[%s4 + $0x8] sm:$0xf]
    %v1352 = vld [vmem:[%s4 + $0xc] sm:$0xf]
    %v1353 = vld [vmem:[%s4 + $0x10] sm:$0xf]
    %v1354 = vld [vmem:[%s4 + $0x14] sm:$0xf]
    %v1355 = vld [vmem:[%s4 + $0x18] sm:$0xf]
    %v1356 = vld [vmem:[%s4 + $0x1c] sm:$0xf]
    %v1357 = vld [vmem:[%s4 + $0x20] sm:$0xf]
    %v1358 = vld [vmem:[%s4 + $0x24] sm:$0xf]
    %v1359 = vld [vmem:[%s4 + $0x28] sm:$0xf]
    %v1360 = vld [vmem:[%s4 + $0x2c] sm:$0xf]
    %v1361 = vld [vmem:[%s4 + $0x30] sm:$0xf]
    %v1362 = vld [vmem:[%s4 + $0x34] sm:$0xf]
    %v1363 = vld [vmem:[%s4 + $0x38] sm:$0xf]
    %v1364 = vld [vmem:[%s4 + $0x3c] sm:$0xf]
    %v1365 = vld [vmem:[%s4 + $0x40] sm:$0xf]
    %v1366 = vld [vmem:[%s4 + $0x44] sm:$0xf]
    %v1367 = vld [vmem:[%s4 + $0x48] sm:$0xf]
    %v1368 = vld [vmem:[%s4 + $0x4c] sm:$0xf]
    %v1369 = vld [vmem:[%s4 + $0x50] sm:$0xf]
    %v1370 = vld [vmem:[%s4 + $0x54] sm:$0xf]
    %v1371 = vld [vmem:[%s4 + $0x58] sm:$0xf]
    %v1372 = vld [vmem:[%s4 + $0x5c] sm:$0xf]
    %v1373 = vld [vmem:[%s4 + $0x60] sm:$0xf]
    %v1374 = vld [vmem:[%s4 + $0x64] sm:$0xf]
    %v1375 = vld [vmem:[%s4 + $0x68] sm:$0xf]
    %v1376 = vld [vmem:[%s4 + $0x6c] sm:$0xf]
    %v1377 = vld [vmem:[%s4 + $0x70] sm:$0xf]
    %v1378 = vld [vmem:[%s4 + $0x74] sm:$0xf]
    %v1379 = vld [vmem:[%s4 + $0x78] sm:$0xf]
    %v1380 = vld [vmem:[%s4 + $0x7c] sm:$0xf]
    %v1381 = vld [vmem:[%s4 + $0x80] sm:$0xf]
    %v1382 = vld [vmem:[%s4 + $0x84] sm:$0xf]
    %v1383 = vld [vmem:[%s4 + $0x88] sm:$0xf]
    %v1384 = vld [vmem:[%s4 + $0x8c] sm:$0xf]
    %v1385 = vld [vmem:[%s4 + $0x90] sm:$0xf]
    %v1386 = vld [vmem:[%s4 + $0x94] sm:$0xf]
    %v1387 = vld [vmem:[%s4 + $0x98] sm:$0xf]
    %v1388 = vld [vmem:[%s4 + $0x9c] sm:$0xf]
    %v1389 = vld [vmem:[%s4 + $0xa0] sm:$0xf]
    %v1390 = vld [vmem:[%s4 + $0xa4] sm:$0xf]
    %v1391 = vld [vmem:[%s4 + $0xa8] sm:$0xf]
    %v1392 = vld [vmem:[%s4 + $0xac] sm:$0xf]
    %v1393 = vld [vmem:[%s4 + $0xb0] sm:$0xf]
    %v1394 = vld [vmem:[%s4 + $0xb4] sm:$0xf]
    %v1395 = vld [vmem:[%s4 + $0xb8] sm:$0xf]
    %v1396 = vld [vmem:[%s4 + $0xbc] sm:$0xf]
    %v1397 = vld [vmem:[%s4 + $0xc0] sm:$0xf]
    %v1398 = vld [vmem:[%s4 + $0xc4] sm:$0xf]
    %v1399 = vld [vmem:[%s4 + $0xc8] sm:$0xf]
    %v1400 = vld [vmem:[%s4 + $0xcc] sm:$0xf]
    %v1401 = vld [vmem:[%s4 + $0xd0] sm:$0xf]
    %v1402 = vld [vmem:[%s4 + $0xd4] sm:$0xf]
    %v1403 = vld [vmem:[%s4 + $0xd8] sm:$0xf]
    %v1404 = vld [vmem:[%s4 + $0xdc] sm:$0xf]
    %v1405 = vld [vmem:[%s4 + $0xe0] sm:$0xf]
    %v1406 = vld [vmem:[%s4 + $0xe4] sm:$0xf]
    %v1407 = vld [vmem:[%s4 + $0xe8] sm:$0xf]
    %v1408 = vld [vmem:[%s4 + $0xec] sm:$0xf]
    %v1409 = vld [vmem:[%s4 + $0xf0] sm:$0xf]
    %v1410 = vld [vmem:[%s4 + $0xf4] sm:$0xf]
    %v1411 = vld [vmem:[%s4 + $0xf8] sm:$0xf]
    %v1412 = vld [vmem:[%s4 + $0xfc] sm:$0xf]
    %v1413 = vpack.c.bf16 %v1346, %v1345
    %v1414 = vpack.c.bf16 %v1348, %v1347
    %v1415 = vunpack.c.l.bf16 %v1413
    %v1416 = vunpack.c.h.bf16 %v1413
    %v1417 = vunpack.c.l.bf16 %v1414
    %v1418 = vunpack.c.h.bf16 %v1414
    %v1419 = vsub.f32 %v1345, %v1415
    %v1420 = vsub.f32 %v1346, %v1416
    %v1421 = vsub.f32 %v1347, %v1417
    %v1422 = vsub.f32 %v1348, %v1418
    %v1423 = vpack.c.bf16 %v1420, %v1419
    %v1424 = vpack.c.bf16 %v1422, %v1421
    %v1427 = vunpack.c.l.b16 %v1413
    %v1428 = vunpack.c.h.b16 %v1413
    %v1429 = vunpack.c.l.b16 %v1414
    %v1430 = vunpack.c.h.b16 %v1414
    %v1431 = vpack.c.b16 %v1427, %v1427
    %v1432 = vpack.c.b16 %v1428, %v1428
    %v1433 = vpack.c.b16 %v1429, %v1429
    %v1434 = vpack.c.b16 %v1430, %v1430
    %v1437 = vunpack.c.l.b16 %v1423
    %v1438 = vunpack.c.h.b16 %v1423
    %v1439 = vunpack.c.l.b16 %v1424
    %v1440 = vunpack.c.h.b16 %v1424
    %v1441 = vpack.c.b16 %v1437, %v1437
    %v1442 = vpack.c.b16 %v1438, %v1438
    %v1443 = vpack.c.b16 %v1439, %v1439
    %v1444 = vpack.c.b16 %v1440, %v1440
    %v1445 = vrot.slane %v1441, 7
    %v1446 = vrot.slane %v1442, 7
    %v1447 = vrot.slane %v1443, 7
    %v1448 = vrot.slane %v1444, 7
    %v1451 = vsel %vm230, %v1431, %v1445
    %v1455 = vsel %vm230, %v1432, %v1446
    %v1459 = vsel %vm230, %v1433, %v1447
    %v1463 = vsel %vm230, %v1434, %v1448
    %v1529 = vunpack.c.l.b16 %v1349
    %v1530 = vunpack.c.l.b16 %v1350
    %v1531 = vunpack.c.l.b16 %v1351
    %v1532 = vunpack.c.l.b16 %v1352
    %v1533 = vunpack.c.l.b16 %v1353
    %v1534 = vunpack.c.l.b16 %v1354
    %v1535 = vunpack.c.l.b16 %v1355
    %v1536 = vunpack.c.l.b16 %v1356
    %v1537 = vunpack.c.l.b16 %v1357
    %v1538 = vunpack.c.l.b16 %v1358
    %v1539 = vunpack.c.l.b16 %v1359
    %v1540 = vunpack.c.l.b16 %v1360
    %v1541 = vunpack.c.l.b16 %v1361
    %v1542 = vunpack.c.l.b16 %v1362
    %v1543 = vunpack.c.l.b16 %v1363
    %v1544 = vunpack.c.l.b16 %v1364
    %v1545 = vunpack.c.l.b16 %v1365
    %v1546 = vunpack.c.l.b16 %v1366
    %v1547 = vunpack.c.l.b16 %v1367
    %v1548 = vunpack.c.l.b16 %v1368
    %v1549 = vunpack.c.l.b16 %v1369
    %v1550 = vunpack.c.l.b16 %v1370
    %v1551 = vunpack.c.l.b16 %v1371
    %v1552 = vunpack.c.l.b16 %v1372
    %v1553 = vunpack.c.l.b16 %v1373
    %v1554 = vunpack.c.l.b16 %v1374
    %v1555 = vunpack.c.l.b16 %v1375
    %v1556 = vunpack.c.l.b16 %v1376
    %v1557 = vunpack.c.l.b16 %v1377
    %v1558 = vunpack.c.l.b16 %v1378
    %v1559 = vunpack.c.l.b16 %v1379
    %v1560 = vunpack.c.l.b16 %v1380
    %v1561 = vunpack.c.l.b16 %v1381
    %v1562 = vunpack.c.l.b16 %v1382
    %v1563 = vunpack.c.l.b16 %v1383
    %v1564 = vunpack.c.l.b16 %v1384
    %v1565 = vunpack.c.l.b16 %v1385
    %v1566 = vunpack.c.l.b16 %v1386
    %v1567 = vunpack.c.l.b16 %v1387
    %v1568 = vunpack.c.l.b16 %v1388
    %v1569 = vunpack.c.l.b16 %v1389
    %v1570 = vunpack.c.l.b16 %v1390
    %v1571 = vunpack.c.l.b16 %v1391
    %v1572 = vunpack.c.l.b16 %v1392
    %v1573 = vunpack.c.l.b16 %v1393
    %v1574 = vunpack.c.l.b16 %v1394
    %v1575 = vunpack.c.l.b16 %v1395
    %v1576 = vunpack.c.l.b16 %v1396
    %v1577 = vunpack.c.l.b16 %v1397
    %v1578 = vunpack.c.l.b16 %v1398
    %v1579 = vunpack.c.l.b16 %v1399
    %v1580 = vunpack.c.l.b16 %v1400
    %v1581 = vunpack.c.l.b16 %v1401
    %v1582 = vunpack.c.l.b16 %v1402
    %v1583 = vunpack.c.l.b16 %v1403
    %v1584 = vunpack.c.l.b16 %v1404
    %v1585 = vunpack.c.l.b16 %v1405
    %v1586 = vunpack.c.l.b16 %v1406
    %v1587 = vunpack.c.l.b16 %v1407
    %v1588 = vunpack.c.l.b16 %v1408
    %v1589 = vunpack.c.l.b16 %v1409
    %v1590 = vunpack.c.l.b16 %v1410
    %v1591 = vunpack.c.l.b16 %v1411
    %v1592 = vunpack.c.l.b16 %v1412
    %v1593 = vpack.c.b16 %v1530, %v1529
    %v1594 = vpack.c.b16 %v1532, %v1531
    %v1595 = vpack.c.b16 %v1534, %v1533
    %v1596 = vpack.c.b16 %v1536, %v1535
    %v1597 = vpack.c.b16 %v1538, %v1537
    %v1598 = vpack.c.b16 %v1540, %v1539
    %v1599 = vpack.c.b16 %v1542, %v1541
    %v1600 = vpack.c.b16 %v1544, %v1543
    %v1601 = vpack.c.b16 %v1546, %v1545
    %v1602 = vpack.c.b16 %v1548, %v1547
    %v1603 = vpack.c.b16 %v1550, %v1549
    %v1604 = vpack.c.b16 %v1552, %v1551
    %v1605 = vpack.c.b16 %v1554, %v1553
    %v1606 = vpack.c.b16 %v1556, %v1555
    %v1607 = vpack.c.b16 %v1558, %v1557
    %v1608 = vpack.c.b16 %v1560, %v1559
    %v1609 = vpack.c.b16 %v1562, %v1561
    %v1610 = vpack.c.b16 %v1564, %v1563
    %v1611 = vpack.c.b16 %v1566, %v1565
    %v1612 = vpack.c.b16 %v1568, %v1567
    %v1613 = vpack.c.b16 %v1570, %v1569
    %v1614 = vpack.c.b16 %v1572, %v1571
    %v1615 = vpack.c.b16 %v1574, %v1573
    %v1616 = vpack.c.b16 %v1576, %v1575
    %v1617 = vpack.c.b16 %v1578, %v1577
    %v1618 = vpack.c.b16 %v1580, %v1579
    %v1619 = vpack.c.b16 %v1582, %v1581
    %v1620 = vpack.c.b16 %v1584, %v1583
    %v1621 = vpack.c.b16 %v1586, %v1585
    %v1622 = vpack.c.b16 %v1588, %v1587
    %v1623 = vpack.c.b16 %v1590, %v1589
    %v1624 = vpack.c.b16 %v1592, %v1591
    %1657 = vmatpush.bf16.msra.mxu0 %v1600
    %1658 = vmatpush.bf16.msra.mxu0 %v1599
    %1659 = vmatpush.bf16.msra.mxu0 %v1598
    %1660 = vmatpush.bf16.msra.mxu0 %v1597
    %1661 = vmatpush.bf16.msra.mxu0 %v1596
    %1662 = vmatpush.bf16.msra.mxu0 %v1595
    %1663 = vmatpush.bf16.msra.mxu0 %v1594
    %1664 = vmatpush.bf16.msra.mxu0 %v1593
    %1665 = vmatmul.bf16.gmra.mxu0 %v1451
    %v1666 = vpop.f32.mrf.mxu0
    %v1667 = vadd.f32 0.0, %v1666
    %v1668 = vpop.f32.mrf.mxu0
    %1669 = vdwg.mxu0
    %1670 = vmatpush.bf16.msra.mxu0 %v1608
    %1671 = vmatpush.bf16.msra.mxu0 %v1607
    %1672 = vmatpush.bf16.msra.mxu0 %v1606
    %1673 = vmatpush.bf16.msra.mxu0 %v1605
    %1674 = vmatpush.bf16.msra.mxu0 %v1604
    %1675 = vmatpush.bf16.msra.mxu0 %v1603
    %1676 = vmatpush.bf16.msra.mxu0 %v1602
    %1677 = vmatpush.bf16.msra.mxu0 %v1601
    %1678 = vmatmul.bf16.gmra.mxu0 %v1455
    %v1679 = vpop.f32.mrf.mxu0
    %v1680 = vadd.f32 %v1667, %v1679
    %v1681 = vpop.f32.mrf.mxu0
    %1682 = vdwg.mxu0
    %1683 = vmatpush.bf16.msra.mxu0 %v1616
    %1684 = vmatpush.bf16.msra.mxu0 %v1615
    %1685 = vmatpush.bf16.msra.mxu0 %v1614
    %1686 = vmatpush.bf16.msra.mxu0 %v1613
    %1687 = vmatpush.bf16.msra.mxu0 %v1612
    %1688 = vmatpush.bf16.msra.mxu0 %v1611
    %1689 = vmatpush.bf16.msra.mxu0 %v1610
    %1690 = vmatpush.bf16.msra.mxu0 %v1609
    %1691 = vmatmul.bf16.gmra.mxu0 %v1459
    %v1692 = vpop.f32.mrf.mxu0
    %v1693 = vadd.f32 %v1680, %v1692
    %v1694 = vpop.f32.mrf.mxu0
    %1695 = vdwg.mxu0
    %1696 = vmatpush.bf16.msra.mxu0 %v1624
    %1697 = vmatpush.bf16.msra.mxu0 %v1623
    %1698 = vmatpush.bf16.msra.mxu0 %v1622
    %1699 = vmatpush.bf16.msra.mxu0 %v1621
    %1700 = vmatpush.bf16.msra.mxu0 %v1620
    %1701 = vmatpush.bf16.msra.mxu0 %v1619
    %1702 = vmatpush.bf16.msra.mxu0 %v1618
    %1703 = vmatpush.bf16.msra.mxu0 %v1617
    %1704 = vmatmul.bf16.gmra.mxu0 %v1463
    %v1705 = vpop.f32.mrf.mxu0
    %v1706 = vadd.f32 %v1693, %v1705
    %v1707 = vpop.f32.mrf.mxu0
    %1708 = vdwg.mxu0
    %v1710 = vrot.slane %v1706, 2
    %v1712 = vadd.f32 %v1706, %v1710
    %v1713 = vld [vmem:[#allocation7 + $0x3] ss:$0 sm:$0xff]
    %v1714 = vadd.f32 %v1712, %v1713
    %v1715 = vxor.u32 %v1714, 2147483648
    %v1716 = vmul.f32 %v1715, 1.442695
    %v1717 = vpow.pop %v1716
    %v1718 = vadd.f32 %v1717, 1.0
    %v1719 = vrcp.pop %v1718
    %v1720 = vmul.f32 %v1718, %v1719
    %v1721 = vsub.f32 1.0, %v1720
    %v1722 = vmul.f32 %v1719, %v1721
    %v1723 = vadd.f32 %v1719, %v1722
    %vm1724 = vweird.f32 %v1718
    %vm1725 = vweird.f32 %v1719
    %vm1726 = vmor %vm1724, %vm1725
    %v1727 = vsel %vm1726, %v1719, %v1723
    %v1728 = vand.u32 2147483647, %v1718
    %vm1729 = vcmp.eq.f32.partialorder %v1728, 8.507059e+37
    %v1730 = vand.u32 %v1718, 2147483648
    %v1731 = vor.u32 1.1754944e-38, %v1730
    %v1732 = vsel %vm1729, %v1731, %v1727
    %v1733 = vmul.f32 1.0, %v1732
    %1735 = vrot.lane.b32.xlu0 %v1733, 96
    %v1736 = vpop.permute.xlu0 %1735
    %v1738 = vmul.f32 %v1714, %v1736
    %vm1739 = vcmask 254976
    %v1740 = vsel %vm1739, %v1738, 0.0
    %v1741 = vrot.slane %v1740, 4
    %v1742 = vadd.f32 %v1740, %v1741
    %v1743 = vrot.slane %v1742, 2
    %v1744 = vadd.f32 %v1742, %v1743
    %v1745 = vrot.slane %v1744, 1
    %v1746 = vadd.f32 %v1744, %v1745
    %v1747 = vrcp.pop 2.0
    %v1748 = vmul.f32 2.0, %v1747
    %v1749 = vsub.f32 1.0, %v1748
    %v1750 = vmul.f32 %v1747, %v1749
    %v1751 = vadd.f32 %v1747, %v1750
    %vm1752 = vweird.f32 %v1747
    %v1753 = vsel %vm1752, %v1747, %v1751
    %v1754 = vmul.f32 %v1746, %v1753
    %v1755 = vsub.f32 %v1738, %v1754
    %v1756 = vmul.f32 %v1755, %v1755
    %v1757 = vsel %vm1739, %v1756, 0.0
    %v1758 = vrot.slane %v1757, 4
    %v1759 = vadd.f32 %v1757, %v1758
    %v1760 = vrot.slane %v1759, 2
    %v1761 = vadd.f32 %v1759, %v1760
    %v1762 = vrot.slane %v1761, 1
    %v1763 = vadd.f32 %v1761, %v1762
    %v1764 = vmul.f32 %v1763, %v1753
    %v1765 = vadd.f32 %v1764, 1e-05
    %v1766 = vrsqrt.pop %v1765
    %v1767 = vmul.f32 %v1766, %v1765
    %v1768 = vmul.f32 %v1767, %v1766
    %v1769 = vmul.f32 0.5, %v1768
    %v1770 = vsub.f32 1.5, %v1769
    %v1771 = vmul.f32 %v1766, %v1770
    %vm1772 = vweird.f32 %v1765
    %vm1773 = vweird.f32 %v1766
    %vm1774 = vmor %vm1772, %vm1773
    %v1775 = vsel %vm1774, %v1766, %v1771
    %v1776 = vmul.f32 %v1755, %v1775
    %v1777 = vld [vmem:[#allocation7 + $0x4] ss:$0 sm:$0xff]
    %v1778 = vmul.f32 %v1776, %v1777
    %v1779 = vld [vmem:[#allocation7 + $0x5] ss:$0 sm:$0xff]
    %v1780 = vadd.f32 %v1778, %v1779
    %v1781 = vmax.f32 %v1780, 0.0
    %v1782 = vld [vmem:[#allocation4] sm:$0xff]
    %v1783 = vld [vmem:[#allocation4 + $0x8] sm:$0xff]
    %v1784 = vld [vmem:[#allocation4 + $0x10] sm:$0xff]
    %v1785 = vld [vmem:[#allocation4 + $0x18] sm:$0xff]
    %v1786 = vld [vmem:[#allocation4 + $0x20] sm:$0xff]
    %v1787 = vld [vmem:[#allocation4 + $0x28] sm:$0xff]
    %v1788 = vld [vmem:[#allocation4 + $0x30] sm:$0xff]
    %v1789 = vld [vmem:[#allocation4 + $0x38] sm:$0xff]
    %v1790 = vld [vmem:[#allocation4 + $0x40] sm:$0xff]
    %v1791 = vld [vmem:[#allocation4 + $0x48] sm:$0xff]
    %v1792 = vld [vmem:[#allocation4 + $0x50] sm:$0xff]
    %v1793 = vld [vmem:[#allocation4 + $0x58] sm:$0xff]
    %v1794 = vld [vmem:[#allocation4 + $0x60] sm:$0xff]
    %v1795 = vld [vmem:[#allocation4 + $0x68] sm:$0xff]
    %v1796 = vld [vmem:[#allocation4 + $0x70] sm:$0xff]
    %v1797 = vld [vmem:[#allocation4 + $0x78] sm:$0xff]
    %v1798 = vpack.c.bf16 %v1781, %v1781
    %v1799 = vunpack.c.l.bf16 %v1798
    %v1800 = vsub.f32 %v1781, %v1799
    %v1801 = vpack.c.bf16 %v1800, %v1800
    %v1803 = vunpack.c.l.b16 %v1801
    %v1804 = vpack.c.b16 %v1803, %v1803
    %v1805 = vrot.slane %v1804, 7
    %v1808 = vsel %vm230, %v1798, %v1805
    %v1825 = vunpack.c.l.b16 %v1782
    %v1826 = vunpack.c.h.b16 %v1782
    %v1827 = vunpack.c.l.b16 %v1783
    %v1828 = vunpack.c.h.b16 %v1783
    %v1829 = vunpack.c.l.b16 %v1784
    %v1830 = vunpack.c.h.b16 %v1784
    %v1831 = vunpack.c.l.b16 %v1785
    %v1832 = vunpack.c.h.b16 %v1785
    %v1833 = vunpack.c.l.b16 %v1786
    %v1834 = vunpack.c.h.b16 %v1786
    %v1835 = vunpack.c.l.b16 %v1787
    %v1836 = vunpack.c.h.b16 %v1787
    %v1837 = vunpack.c.l.b16 %v1788
    %v1838 = vunpack.c.h.b16 %v1788
    %v1839 = vunpack.c.l.b16 %v1789
    %v1840 = vunpack.c.h.b16 %v1789
    %v1841 = vunpack.c.l.b16 %v1790
    %v1842 = vunpack.c.h.b16 %v1790
    %v1843 = vunpack.c.l.b16 %v1791
    %v1844 = vunpack.c.h.b16 %v1791
    %v1845 = vunpack.c.l.b16 %v1792
    %v1846 = vunpack.c.h.b16 %v1792
    %v1847 = vunpack.c.l.b16 %v1793
    %v1848 = vunpack.c.h.b16 %v1793
    %v1849 = vunpack.c.l.b16 %v1794
    %v1850 = vunpack.c.h.b16 %v1794
    %v1851 = vunpack.c.l.b16 %v1795
    %v1852 = vunpack.c.h.b16 %v1795
    %v1853 = vunpack.c.l.b16 %v1796
    %v1854 = vunpack.c.h.b16 %v1796
    %v1855 = vunpack.c.l.b16 %v1797
    %v1856 = vunpack.c.h.b16 %v1797
    %v1857 = vpack.c.b16 %v1833, %v1825
    %v1858 = vpack.c.b16 %v1834, %v1826
    %v1859 = vpack.c.b16 %v1835, %v1827
    %v1860 = vpack.c.b16 %v1836, %v1828
    %v1861 = vpack.c.b16 %v1837, %v1829
    %v1862 = vpack.c.b16 %v1838, %v1830
    %v1863 = vpack.c.b16 %v1839, %v1831
    %v1864 = vpack.c.b16 %v1840, %v1832
    %v1865 = vpack.c.b16 %v1849, %v1841
    %v1866 = vpack.c.b16 %v1850, %v1842
    %v1867 = vpack.c.b16 %v1851, %v1843
    %v1868 = vpack.c.b16 %v1852, %v1844
    %v1869 = vpack.c.b16 %v1853, %v1845
    %v1870 = vpack.c.b16 %v1854, %v1846
    %v1871 = vpack.c.b16 %v1855, %v1847
    %v1872 = vpack.c.b16 %v1856, %v1848
    %v1889 = vsel %vm314, %v1808, 0
    %1891 = vmatpush.bf16.msra.mxu0 0
    %1892 = vmatpush.bf16.msra.mxu0 0
    %1893 = vmatpush.bf16.msra.mxu0 0
    %1894 = vmatpush.bf16.msra.mxu0 0
    %1895 = vmatpush.bf16.msra.mxu0 0
    %1896 = vmatpush.bf16.msra.mxu0 0
    %1897 = vmatpush.bf16.msra.mxu0 %v1865
    %1898 = vmatpush.bf16.msra.mxu0 %v1857
    %1899 = vmatmul.bf16.gmra.mxu0 %v1889
    %v1900 = vpop.f32.mrf.mxu0
    %v1901 = vadd.f32 0.0, %v1900
    %v1902 = vpop.f32.mrf.mxu0
    %1903 = vdwg.mxu0
    %1904 = vmatpush.bf16.msra.mxu0 0
    %1905 = vmatpush.bf16.msra.mxu0 0
    %1906 = vmatpush.bf16.msra.mxu0 0
    %1907 = vmatpush.bf16.msra.mxu0 0
    %1908 = vmatpush.bf16.msra.mxu0 0
    %1909 = vmatpush.bf16.msra.mxu0 0
    %1910 = vmatpush.bf16.msra.mxu0 %v1866
    %1911 = vmatpush.bf16.msra.mxu0 %v1858
    %1912 = vmatmul.bf16.gmra.mxu0 %v1889
    %v1913 = vpop.f32.mrf.mxu0
    %v1914 = vadd.f32 0.0, %v1913
    %v1915 = vpop.f32.mrf.mxu0
    %1916 = vdwg.mxu0
    %1917 = vmatpush.bf16.msra.mxu0 0
    %1918 = vmatpush.bf16.msra.mxu0 0
    %1919 = vmatpush.bf16.msra.mxu0 0
    %1920 = vmatpush.bf16.msra.mxu0 0
    %1921 = vmatpush.bf16.msra.mxu0 0
    %1922 = vmatpush.bf16.msra.mxu0 0
    %1923 = vmatpush.bf16.msra.mxu0 %v1867
    %1924 = vmatpush.bf16.msra.mxu0 %v1859
    %1925 = vmatmul.bf16.gmra.mxu0 %v1889
    %v1926 = vpop.f32.mrf.mxu0
    %v1927 = vadd.f32 0.0, %v1926
    %v1928 = vpop.f32.mrf.mxu0
    %1929 = vdwg.mxu0
    %1930 = vmatpush.bf16.msra.mxu0 0
    %1931 = vmatpush.bf16.msra.mxu0 0
    %1932 = vmatpush.bf16.msra.mxu0 0
    %1933 = vmatpush.bf16.msra.mxu0 0
    %1934 = vmatpush.bf16.msra.mxu0 0
    %1935 = vmatpush.bf16.msra.mxu0 0
    %1936 = vmatpush.bf16.msra.mxu0 %v1868
    %1937 = vmatpush.bf16.msra.mxu0 %v1860
    %1938 = vmatmul.bf16.gmra.mxu0 %v1889
    %v1939 = vpop.f32.mrf.mxu0
    %v1940 = vadd.f32 0.0, %v1939
    %v1941 = vpop.f32.mrf.mxu0
    %1942 = vdwg.mxu0
    %1943 = vmatpush.bf16.msra.mxu0 0
    %1944 = vmatpush.bf16.msra.mxu0 0
    %1945 = vmatpush.bf16.msra.mxu0 0
    %1946 = vmatpush.bf16.msra.mxu0 0
    %1947 = vmatpush.bf16.msra.mxu0 0
    %1948 = vmatpush.bf16.msra.mxu0 0
    %1949 = vmatpush.bf16.msra.mxu0 %v1869
    %1950 = vmatpush.bf16.msra.mxu0 %v1861
    %1951 = vmatmul.bf16.gmra.mxu0 %v1889
    %v1952 = vpop.f32.mrf.mxu0
    %v1953 = vadd.f32 0.0, %v1952
    %v1954 = vpop.f32.mrf.mxu0
    %1955 = vdwg.mxu0
    %1956 = vmatpush.bf16.msra.mxu0 0
    %1957 = vmatpush.bf16.msra.mxu0 0
    %1958 = vmatpush.bf16.msra.mxu0 0
    %1959 = vmatpush.bf16.msra.mxu0 0
    %1960 = vmatpush.bf16.msra.mxu0 0
    %1961 = vmatpush.bf16.msra.mxu0 0
    %1962 = vmatpush.bf16.msra.mxu0 %v1870
    %1963 = vmatpush.bf16.msra.mxu0 %v1862
    %1964 = vmatmul.bf16.gmra.mxu0 %v1889
    %v1965 = vpop.f32.mrf.mxu0
    %v1966 = vadd.f32 0.0, %v1965
    %v1967 = vpop.f32.mrf.mxu0
    %1968 = vdwg.mxu0
    %1969 = vmatpush.bf16.msra.mxu0 0
    %1970 = vmatpush.bf16.msra.mxu0 0
    %1971 = vmatpush.bf16.msra.mxu0 0
    %1972 = vmatpush.bf16.msra.mxu0 0
    %1973 = vmatpush.bf16.msra.mxu0 0
    %1974 = vmatpush.bf16.msra.mxu0 0
    %1975 = vmatpush.bf16.msra.mxu0 %v1871
    %1976 = vmatpush.bf16.msra.mxu0 %v1863
    %1977 = vmatmul.bf16.gmra.mxu0 %v1889
    %v1978 = vpop.f32.mrf.mxu0
    %v1979 = vadd.f32 0.0, %v1978
    %v1980 = vpop.f32.mrf.mxu0
    %1981 = vdwg.mxu0
    %1982 = vmatpush.bf16.msra.mxu0 0
    %1983 = vmatpush.bf16.msra.mxu0 0
    %1984 = vmatpush.bf16.msra.mxu0 0
    %1985 = vmatpush.bf16.msra.mxu0 0
    %1986 = vmatpush.bf16.msra.mxu0 0
    %1987 = vmatpush.bf16.msra.mxu0 0
    %1988 = vmatpush.bf16.msra.mxu0 %v1872
    %1989 = vmatpush.bf16.msra.mxu0 %v1864
    %1990 = vmatmul.bf16.gmra.mxu0 %v1889
    %v1991 = vpop.f32.mrf.mxu0
    %v1992 = vadd.f32 0.0, %v1991
    %v1993 = vpop.f32.mrf.mxu0
    %1994 = vdwg.mxu0
    %v2003 = vrot.slane %v1901, 2
    %v2004 = vrot.slane %v1914, 2
    %v2005 = vrot.slane %v1927, 2
    %v2006 = vrot.slane %v1940, 2
    %v2007 = vrot.slane %v1953, 2
    %v2008 = vrot.slane %v1966, 2
    %v2009 = vrot.slane %v1979, 2
    %v2010 = vrot.slane %v1992, 2
    %v2019 = vadd.f32 %v1901, %v2003
    %v2020 = vadd.f32 %v1914, %v2004
    %v2021 = vadd.f32 %v1927, %v2005
    %v2022 = vadd.f32 %v1940, %v2006
    %v2023 = vadd.f32 %v1953, %v2007
    %v2024 = vadd.f32 %v1966, %v2008
    %v2025 = vadd.f32 %v1979, %v2009
    %v2026 = vadd.f32 %v1992, %v2010
    %s2027 = scalar_lea.vmem [#allocation7], 6
    %v2028 = vld [vmem:[%s2027] ss:$8 sm:$0xf]
    %v2029 = vld [vmem:[%s2027] ss:$8 sm:$0xf0]
    %v2030 = vor.u32 %v2028, %v2029
    %v2032 = vperm.slane %v2030, 0
    %v2033 = vperm.slane %v2030, 1
    %v2034 = vperm.slane %v2030, 2
    %v2035 = vperm.slane %v2030, 3
    %v2036 = vperm.slane %v2030, 4
    %v2037 = vperm.slane %v2030, 5
    %v2038 = vperm.slane %v2030, 6
    %v2039 = vperm.slane %v2030, 7
    %v2048 = vadd.f32 %v2019, %v2032
    %v2049 = vadd.f32 %v2020, %v2033
    %v2050 = vadd.f32 %v2021, %v2034
    %v2051 = vadd.f32 %v2022, %v2035
    %v2052 = vadd.f32 %v2023, %v2036
    %v2053 = vadd.f32 %v2024, %v2037
    %v2054 = vadd.f32 %v2025, %v2038
    %v2055 = vadd.f32 %v2026, %v2039
    %v2056 = vsel %vm561, %v2048, 0.0
    %v2057 = vrot.slane %v2056, 4
    %v2058 = vadd.f32 %v2056, %v2057
    %v2059 = vrot.slane %v2058, 2
    %v2060 = vadd.f32 %v2058, %v2059
    %v2061 = vrot.slane %v2060, 1
    %v2062 = vadd.f32 %v2060, %v2061
    %v2063 = vsel %vm561, %v2049, 0.0
    %v2064 = vrot.slane %v2063, 4
    %v2065 = vadd.f32 %v2063, %v2064
    %v2066 = vrot.slane %v2065, 2
    %v2067 = vadd.f32 %v2065, %v2066
    %v2068 = vrot.slane %v2067, 1
    %v2069 = vadd.f32 %v2067, %v2068
    %v2070 = vsel %vm561, %v2050, 0.0
    %v2071 = vrot.slane %v2070, 4
    %v2072 = vadd.f32 %v2070, %v2071
    %v2073 = vrot.slane %v2072, 2
    %v2074 = vadd.f32 %v2072, %v2073
    %v2075 = vrot.slane %v2074, 1
    %v2076 = vadd.f32 %v2074, %v2075
    %v2077 = vsel %vm561, %v2051, 0.0
    %v2078 = vrot.slane %v2077, 4
    %v2079 = vadd.f32 %v2077, %v2078
    %v2080 = vrot.slane %v2079, 2
    %v2081 = vadd.f32 %v2079, %v2080
    %v2082 = vrot.slane %v2081, 1
    %v2083 = vadd.f32 %v2081, %v2082
    %v2084 = vsel %vm561, %v2052, 0.0
    %v2085 = vrot.slane %v2084, 4
    %v2086 = vadd.f32 %v2084, %v2085
    %v2087 = vrot.slane %v2086, 2
    %v2088 = vadd.f32 %v2086, %v2087
    %v2089 = vrot.slane %v2088, 1
    %v2090 = vadd.f32 %v2088, %v2089
    %v2091 = vsel %vm561, %v2053, 0.0
    %v2092 = vrot.slane %v2091, 4
    %v2093 = vadd.f32 %v2091, %v2092
    %v2094 = vrot.slane %v2093, 2
    %v2095 = vadd.f32 %v2093, %v2094
    %v2096 = vrot.slane %v2095, 1
    %v2097 = vadd.f32 %v2095, %v2096
    %v2098 = vsel %vm561, %v2054, 0.0
    %v2099 = vrot.slane %v2098, 4
    %v2100 = vadd.f32 %v2098, %v2099
    %v2101 = vrot.slane %v2100, 2
    %v2102 = vadd.f32 %v2100, %v2101
    %v2103 = vrot.slane %v2102, 1
    %v2104 = vadd.f32 %v2102, %v2103
    %v2105 = vsel %vm561, %v2055, 0.0
    %v2106 = vrot.slane %v2105, 4
    %v2107 = vadd.f32 %v2105, %v2106
    %v2108 = vrot.slane %v2107, 2
    %v2109 = vadd.f32 %v2107, %v2108
    %v2110 = vrot.slane %v2109, 1
    %v2111 = vadd.f32 %v2109, %v2110
    %v2112 = vmul.f32 %v2062, %v1753
    %v2113 = vmul.f32 %v2069, %v1753
    %v2114 = vmul.f32 %v2076, %v1753
    %v2115 = vmul.f32 %v2083, %v1753
    %v2116 = vmul.f32 %v2090, %v1753
    %v2117 = vmul.f32 %v2097, %v1753
    %v2118 = vmul.f32 %v2104, %v1753
    %v2119 = vmul.f32 %v2111, %v1753
    %v2120 = vsub.f32 %v2048, %v2112
    %v2121 = vsub.f32 %v2049, %v2113
    %v2122 = vsub.f32 %v2050, %v2114
    %v2123 = vsub.f32 %v2051, %v2115
    %v2124 = vsub.f32 %v2052, %v2116
    %v2125 = vsub.f32 %v2053, %v2117
    %v2126 = vsub.f32 %v2054, %v2118
    %v2127 = vsub.f32 %v2055, %v2119
    %v2128 = vmul.f32 %v2120, %v2120
    %v2129 = vmul.f32 %v2121, %v2121
    %v2130 = vmul.f32 %v2122, %v2122
    %v2131 = vmul.f32 %v2123, %v2123
    %v2132 = vmul.f32 %v2124, %v2124
    %v2133 = vmul.f32 %v2125, %v2125
    %v2134 = vmul.f32 %v2126, %v2126
    %v2135 = vmul.f32 %v2127, %v2127
    %v2136 = vsel %vm561, %v2128, 0.0
    %v2137 = vrot.slane %v2136, 4
    %v2138 = vadd.f32 %v2136, %v2137
    %v2139 = vrot.slane %v2138, 2
    %v2140 = vadd.f32 %v2138, %v2139
    %v2141 = vrot.slane %v2140, 1
    %v2142 = vadd.f32 %v2140, %v2141
    %v2143 = vsel %vm561, %v2129, 0.0
    %v2144 = vrot.slane %v2143, 4
    %v2145 = vadd.f32 %v2143, %v2144
    %v2146 = vrot.slane %v2145, 2
    %v2147 = vadd.f32 %v2145, %v2146
    %v2148 = vrot.slane %v2147, 1
    %v2149 = vadd.f32 %v2147, %v2148
    %v2150 = vsel %vm561, %v2130, 0.0
    %v2151 = vrot.slane %v2150, 4
    %v2152 = vadd.f32 %v2150, %v2151
    %v2153 = vrot.slane %v2152, 2
    %v2154 = vadd.f32 %v2152, %v2153
    %v2155 = vrot.slane %v2154, 1
    %v2156 = vadd.f32 %v2154, %v2155
    %v2157 = vsel %vm561, %v2131, 0.0
    %v2158 = vrot.slane %v2157, 4
    %v2159 = vadd.f32 %v2157, %v2158
    %v2160 = vrot.slane %v2159, 2
    %v2161 = vadd.f32 %v2159, %v2160
    %v2162 = vrot.slane %v2161, 1
    %v2163 = vadd.f32 %v2161, %v2162
    %v2164 = vsel %vm561, %v2132, 0.0
    %v2165 = vrot.slane %v2164, 4
    %v2166 = vadd.f32 %v2164, %v2165
    %v2167 = vrot.slane %v2166, 2
    %v2168 = vadd.f32 %v2166, %v2167
    %v2169 = vrot.slane %v2168, 1
    %v2170 = vadd.f32 %v2168, %v2169
    %v2171 = vsel %vm561, %v2133, 0.0
    %v2172 = vrot.slane %v2171, 4
    %v2173 = vadd.f32 %v2171, %v2172
    %v2174 = vrot.slane %v2173, 2
    %v2175 = vadd.f32 %v2173, %v2174
    %v2176 = vrot.slane %v2175, 1
    %v2177 = vadd.f32 %v2175, %v2176
    %v2178 = vsel %vm561, %v2134, 0.0
    %v2179 = vrot.slane %v2178, 4
    %v2180 = vadd.f32 %v2178, %v2179
    %v2181 = vrot.slane %v2180, 2
    %v2182 = vadd.f32 %v2180, %v2181
    %v2183 = vrot.slane %v2182, 1
    %v2184 = vadd.f32 %v2182, %v2183
    %v2185 = vsel %vm561, %v2135, 0.0
    %v2186 = vrot.slane %v2185, 4
    %v2187 = vadd.f32 %v2185, %v2186
    %v2188 = vrot.slane %v2187, 2
    %v2189 = vadd.f32 %v2187, %v2188
    %v2190 = vrot.slane %v2189, 1
    %v2191 = vadd.f32 %v2189, %v2190
    %v2192 = vmul.f32 %v2142, %v1753
    %v2193 = vmul.f32 %v2149, %v1753
    %v2194 = vmul.f32 %v2156, %v1753
    %v2195 = vmul.f32 %v2163, %v1753
    %v2196 = vmul.f32 %v2170, %v1753
    %v2197 = vmul.f32 %v2177, %v1753
    %v2198 = vmul.f32 %v2184, %v1753
    %v2199 = vmul.f32 %v2191, %v1753
    %v2200 = vadd.f32 %v2192, 1e-05
    %v2201 = vadd.f32 %v2193, 1e-05
    %v2202 = vadd.f32 %v2194, 1e-05
    %v2203 = vadd.f32 %v2195, 1e-05
    %v2204 = vadd.f32 %v2196, 1e-05
    %v2205 = vadd.f32 %v2197, 1e-05
    %v2206 = vadd.f32 %v2198, 1e-05
    %v2207 = vadd.f32 %v2199, 1e-05
    %v2208 = vrsqrt.pop %v2200
    %v2209 = vmul.f32 %v2208, %v2200
    %v2210 = vmul.f32 %v2209, %v2208
    %v2211 = vmul.f32 0.5, %v2210
    %v2212 = vsub.f32 1.5, %v2211
    %v2213 = vmul.f32 %v2208, %v2212
    %vm2214 = vweird.f32 %v2200
    %vm2215 = vweird.f32 %v2208
    %vm2216 = vmor %vm2214, %vm2215
    %v2217 = vsel %vm2216, %v2208, %v2213
    %v2218 = vrsqrt.pop %v2201
    %v2219 = vmul.f32 %v2218, %v2201
    %v2220 = vmul.f32 %v2219, %v2218
    %v2221 = vmul.f32 0.5, %v2220
    %v2222 = vsub.f32 1.5, %v2221
    %v2223 = vmul.f32 %v2218, %v2222
    %vm2224 = vweird.f32 %v2201
    %vm2225 = vweird.f32 %v2218
    %vm2226 = vmor %vm2224, %vm2225
    %v2227 = vsel %vm2226, %v2218, %v2223
    %v2228 = vrsqrt.pop %v2202
    %v2229 = vmul.f32 %v2228, %v2202
    %v2230 = vmul.f32 %v2229, %v2228
    %v2231 = vmul.f32 0.5, %v2230
    %v2232 = vsub.f32 1.5, %v2231
    %v2233 = vmul.f32 %v2228, %v2232
    %vm2234 = vweird.f32 %v2202
    %vm2235 = vweird.f32 %v2228
    %vm2236 = vmor %vm2234, %vm2235
    %v2237 = vsel %vm2236, %v2228, %v2233
    %v2238 = vrsqrt.pop %v2203
    %v2239 = vmul.f32 %v2238, %v2203
    %v2240 = vmul.f32 %v2239, %v2238
    %v2241 = vmul.f32 0.5, %v2240
    %v2242 = vsub.f32 1.5, %v2241
    %v2243 = vmul.f32 %v2238, %v2242
    %vm2244 = vweird.f32 %v2203
    %vm2245 = vweird.f32 %v2238
    %vm2246 = vmor %vm2244, %vm2245
    %v2247 = vsel %vm2246, %v2238, %v2243
    %v2248 = vrsqrt.pop %v2204
    %v2249 = vmul.f32 %v2248, %v2204
    %v2250 = vmul.f32 %v2249, %v2248
    %v2251 = vmul.f32 0.5, %v2250
    %v2252 = vsub.f32 1.5, %v2251
    %v2253 = vmul.f32 %v2248, %v2252
    %vm2254 = vweird.f32 %v2204
    %vm2255 = vweird.f32 %v2248
    %vm2256 = vmor %vm2254, %vm2255
    %v2257 = vsel %vm2256, %v2248, %v2253
    %v2258 = vrsqrt.pop %v2205
    %v2259 = vmul.f32 %v2258, %v2205
    %v2260 = vmul.f32 %v2259, %v2258
    %v2261 = vmul.f32 0.5, %v2260
    %v2262 = vsub.f32 1.5, %v2261
    %v2263 = vmul.f32 %v2258, %v2262
    %vm2264 = vweird.f32 %v2205
    %vm2265 = vweird.f32 %v2258
    %vm2266 = vmor %vm2264, %vm2265
    %v2267 = vsel %vm2266, %v2258, %v2263
    %v2268 = vrsqrt.pop %v2206
    %v2269 = vmul.f32 %v2268, %v2206
    %v2270 = vmul.f32 %v2269, %v2268
    %v2271 = vmul.f32 0.5, %v2270
    %v2272 = vsub.f32 1.5, %v2271
    %v2273 = vmul.f32 %v2268, %v2272
    %vm2274 = vweird.f32 %v2206
    %vm2275 = vweird.f32 %v2268
    %vm2276 = vmor %vm2274, %vm2275
    %v2277 = vsel %vm2276, %v2268, %v2273
    %v2278 = vrsqrt.pop %v2207
    %v2279 = vmul.f32 %v2278, %v2207
    %v2280 = vmul.f32 %v2279, %v2278
    %v2281 = vmul.f32 0.5, %v2280
    %v2282 = vsub.f32 1.5, %v2281
    %v2283 = vmul.f32 %v2278, %v2282
    %vm2284 = vweird.f32 %v2207
    %vm2285 = vweird.f32 %v2278
    %vm2286 = vmor %vm2284, %vm2285
    %v2287 = vsel %vm2286, %v2278, %v2283
    %v2288 = vmul.f32 %v2120, %v2217
    %v2289 = vmul.f32 %v2121, %v2227
    %v2290 = vmul.f32 %v2122, %v2237
    %v2291 = vmul.f32 %v2123, %v2247
    %v2292 = vmul.f32 %v2124, %v2257
    %v2293 = vmul.f32 %v2125, %v2267
    %v2294 = vmul.f32 %v2126, %v2277
    %v2295 = vmul.f32 %v2127, %v2287
    %s2296 = scalar_lea.vmem [#allocation7], 7
    %v2297 = vld [vmem:[%s2296] ss:$8 sm:$0xf]
    %v2298 = vld [vmem:[%s2296] ss:$8 sm:$0xf0]
    %v2299 = vor.u32 %v2297, %v2298
    %v2301 = vperm.slane %v2299, 0
    %v2302 = vperm.slane %v2299, 1
    %v2303 = vperm.slane %v2299, 2
    %v2304 = vperm.slane %v2299, 3
    %v2305 = vperm.slane %v2299, 4
    %v2306 = vperm.slane %v2299, 5
    %v2307 = vperm.slane %v2299, 6
    %v2308 = vperm.slane %v2299, 7
    %v2317 = vmul.f32 %v2288, %v2301
    %v2318 = vmul.f32 %v2289, %v2302
    %v2319 = vmul.f32 %v2290, %v2303
    %v2320 = vmul.f32 %v2291, %v2304
    %v2321 = vmul.f32 %v2292, %v2305
    %v2322 = vmul.f32 %v2293, %v2306
    %v2323 = vmul.f32 %v2294, %v2307
    %v2324 = vmul.f32 %v2295, %v2308
    %s2325 = scalar_lea.vmem [#allocation7], 64
    %v2326 = vld [vmem:[%s2325] ss:$8 sm:$0xf]
    %v2327 = vld [vmem:[%s2325] ss:$8 sm:$0xf0]
    %v2328 = vor.u32 %v2326, %v2327
    %v2330 = vperm.slane %v2328, 0
    %v2331 = vperm.slane %v2328, 1
    %v2332 = vperm.slane %v2328, 2
    %v2333 = vperm.slane %v2328, 3
    %v2334 = vperm.slane %v2328, 4
    %v2335 = vperm.slane %v2328, 5
    %v2336 = vperm.slane %v2328, 6
    %v2337 = vperm.slane %v2328, 7
    %v2346 = vadd.f32 %v2317, %v2330
    %v2347 = vadd.f32 %v2318, %v2331
    %v2348 = vadd.f32 %v2319, %v2332
    %v2349 = vadd.f32 %v2320, %v2333
    %v2350 = vadd.f32 %v2321, %v2334
    %v2351 = vadd.f32 %v2322, %v2335
    %v2352 = vadd.f32 %v2323, %v2336
    %v2353 = vadd.f32 %v2324, %v2337
    %v2354 = vmax.f32 %v2346, 0.0
    %v2355 = vmax.f32 %v2347, 0.0
    %v2356 = vmax.f32 %v2348, 0.0
    %v2357 = vmax.f32 %v2349, 0.0
    %v2358 = vmax.f32 %v2350, 0.0
    %v2359 = vmax.f32 %v2351, 0.0
    %v2360 = vmax.f32 %v2352, 0.0
    %v2361 = vmax.f32 %v2353, 0.0
    %s2362 = smul.u32 4, 128
    %s2363 = smul.u32 %s2362, 1
    %s2364 = sshll.u32 %s2363, 4
    %2365 = dma.done [#allocation3], %s2364
    %v2366 = vld [vmem:[#allocation2] sm:$0xf]
    %v2367 = vld [vmem:[#allocation2 + $0x4] sm:$0xf]
    %v2368 = vld [vmem:[#allocation2 + $0x8] sm:$0xf]
    %v2369 = vld [vmem:[#allocation2 + $0xc] sm:$0xf]
    %v2370 = vld [vmem:[#allocation2 + $0x10] sm:$0xf]
    %v2371 = vld [vmem:[#allocation2 + $0x14] sm:$0xf]
    %v2372 = vld [vmem:[#allocation2 + $0x18] sm:$0xf]
    %v2373 = vld [vmem:[#allocation2 + $0x1c] sm:$0xf]
    %v2374 = vld [vmem:[#allocation2 + $0x20] sm:$0xf]
    %v2375 = vld [vmem:[#allocation2 + $0x24] sm:$0xf]
    %v2376 = vld [vmem:[#allocation2 + $0x28] sm:$0xf]
    %v2377 = vld [vmem:[#allocation2 + $0x2c] sm:$0xf]
    %v2378 = vld [vmem:[#allocation2 + $0x30] sm:$0xf]
    %v2379 = vld [vmem:[#allocation2 + $0x34] sm:$0xf]
    %v2380 = vld [vmem:[#allocation2 + $0x38] sm:$0xf]
    %v2381 = vld [vmem:[#allocation2 + $0x3c] sm:$0xf]
    %v2382 = vld [vmem:[#allocation2 + $0x40] sm:$0xf]
    %v2383 = vld [vmem:[#allocation2 + $0x44] sm:$0xf]
    %v2384 = vld [vmem:[#allocation2 + $0x48] sm:$0xf]
    %v2385 = vld [vmem:[#allocation2 + $0x4c] sm:$0xf]
    %v2386 = vld [vmem:[#allocation2 + $0x50] sm:$0xf]
    %v2387 = vld [vmem:[#allocation2 + $0x54] sm:$0xf]
    %v2388 = vld [vmem:[#allocation2 + $0x58] sm:$0xf]
    %v2389 = vld [vmem:[#allocation2 + $0x5c] sm:$0xf]
    %v2390 = vld [vmem:[#allocation2 + $0x60] sm:$0xf]
    %v2391 = vld [vmem:[#allocation2 + $0x64] sm:$0xf]
    %v2392 = vld [vmem:[#allocation2 + $0x68] sm:$0xf]
    %v2393 = vld [vmem:[#allocation2 + $0x6c] sm:$0xf]
    %v2394 = vld [vmem:[#allocation2 + $0x70] sm:$0xf]
    %v2395 = vld [vmem:[#allocation2 + $0x74] sm:$0xf]
    %v2396 = vld [vmem:[#allocation2 + $0x78] sm:$0xf]
    %v2397 = vld [vmem:[#allocation2 + $0x7c] sm:$0xf]
    %v2398 = vld [vmem:[#allocation2 + $0x80] sm:$0xf]
    %v2399 = vld [vmem:[#allocation2 + $0x84] sm:$0xf]
    %v2400 = vld [vmem:[#allocation2 + $0x88] sm:$0xf]
    %v2401 = vld [vmem:[#allocation2 + $0x8c] sm:$0xf]
    %v2402 = vld [vmem:[#allocation2 + $0x90] sm:$0xf]
    %v2403 = vld [vmem:[#allocation2 + $0x94] sm:$0xf]
    %v2404 = vld [vmem:[#allocation2 + $0x98] sm:$0xf]
    %v2405 = vld [vmem:[#allocation2 + $0x9c] sm:$0xf]
    %v2406 = vld [vmem:[#allocation2 + $0xa0] sm:$0xf]
    %v2407 = vld [vmem:[#allocation2 + $0xa4] sm:$0xf]
    %v2408 = vld [vmem:[#allocation2 + $0xa8] sm:$0xf]
    %v2409 = vld [vmem:[#allocation2 + $0xac] sm:$0xf]
    %v2410 = vld [vmem:[#allocation2 + $0xb0] sm:$0xf]
    %v2411 = vld [vmem:[#allocation2 + $0xb4] sm:$0xf]
    %v2412 = vld [vmem:[#allocation2 + $0xb8] sm:$0xf]
    %v2413 = vld [vmem:[#allocation2 + $0xbc] sm:$0xf]
    %v2414 = vld [vmem:[#allocation2 + $0xc0] sm:$0xf]
    %v2415 = vld [vmem:[#allocation2 + $0xc4] sm:$0xf]
    %v2416 = vld [vmem:[#allocation2 + $0xc8] sm:$0xf]
    %v2417 = vld [vmem:[#allocation2 + $0xcc] sm:$0xf]
    %v2418 = vld [vmem:[#allocation2 + $0xd0] sm:$0xf]
    %v2419 = vld [vmem:[#allocation2 + $0xd4] sm:$0xf]
    %v2420 = vld [vmem:[#allocation2 + $0xd8] sm:$0xf]
    %v2421 = vld [vmem:[#allocation2 + $0xdc] sm:$0xf]
    %v2422 = vld [vmem:[#allocation2 + $0xe0] sm:$0xf]
    %v2423 = vld [vmem:[#allocation2 + $0xe4] sm:$0xf]
    %v2424 = vld [vmem:[#allocation2 + $0xe8] sm:$0xf]
    %v2425 = vld [vmem:[#allocation2 + $0xec] sm:$0xf]
    %v2426 = vld [vmem:[#allocation2 + $0xf0] sm:$0xf]
    %v2427 = vld [vmem:[#allocation2 + $0xf4] sm:$0xf]
    %v2428 = vld [vmem:[#allocation2 + $0xf8] sm:$0xf]
    %v2429 = vld [vmem:[#allocation2 + $0xfc] sm:$0xf]
    %v2430 = vld [vmem:[#allocation2 + $0x100] sm:$0xf]
    %v2431 = vld [vmem:[#allocation2 + $0x104] sm:$0xf]
    %v2432 = vld [vmem:[#allocation2 + $0x108] sm:$0xf]
    %v2433 = vld [vmem:[#allocation2 + $0x10c] sm:$0xf]
    %v2434 = vld [vmem:[#allocation2 + $0x110] sm:$0xf]
    %v2435 = vld [vmem:[#allocation2 + $0x114] sm:$0xf]
    %v2436 = vld [vmem:[#allocation2 + $0x118] sm:$0xf]
    %v2437 = vld [vmem:[#allocation2 + $0x11c] sm:$0xf]
    %v2438 = vld [vmem:[#allocation2 + $0x120] sm:$0xf]
    %v2439 = vld [vmem:[#allocation2 + $0x124] sm:$0xf]
    %v2440 = vld [vmem:[#allocation2 + $0x128] sm:$0xf]
    %v2441 = vld [vmem:[#allocation2 + $0x12c] sm:$0xf]
    %v2442 = vld [vmem:[#allocation2 + $0x130] sm:$0xf]
    %v2443 = vld [vmem:[#allocation2 + $0x134] sm:$0xf]
    %v2444 = vld [vmem:[#allocation2 + $0x138] sm:$0xf]
    %v2445 = vld [vmem:[#allocation2 + $0x13c] sm:$0xf]
    %v2446 = vld [vmem:[#allocation2 + $0x140] sm:$0xf]
    %v2447 = vld [vmem:[#allocation2 + $0x144] sm:$0xf]
    %v2448 = vld [vmem:[#allocation2 + $0x148] sm:$0xf]
    %v2449 = vld [vmem:[#allocation2 + $0x14c] sm:$0xf]
    %v2450 = vld [vmem:[#allocation2 + $0x150] sm:$0xf]
    %v2451 = vld [vmem:[#allocation2 + $0x154] sm:$0xf]
    %v2452 = vld [vmem:[#allocation2 + $0x158] sm:$0xf]
    %v2453 = vld [vmem:[#allocation2 + $0x15c] sm:$0xf]
    %v2454 = vld [vmem:[#allocation2 + $0x160] sm:$0xf]
    %v2455 = vld [vmem:[#allocation2 + $0x164] sm:$0xf]
    %v2456 = vld [vmem:[#allocation2 + $0x168] sm:$0xf]
    %v2457 = vld [vmem:[#allocation2 + $0x16c] sm:$0xf]
    %v2458 = vld [vmem:[#allocation2 + $0x170] sm:$0xf]
    %v2459 = vld [vmem:[#allocation2 + $0x174] sm:$0xf]
    %v2460 = vld [vmem:[#allocation2 + $0x178] sm:$0xf]
    %v2461 = vld [vmem:[#allocation2 + $0x17c] sm:$0xf]
    %v2462 = vld [vmem:[#allocation2 + $0x180] sm:$0xf]
    %v2463 = vld [vmem:[#allocation2 + $0x184] sm:$0xf]
    %v2464 = vld [vmem:[#allocation2 + $0x188] sm:$0xf]
    %v2465 = vld [vmem:[#allocation2 + $0x18c] sm:$0xf]
    %v2466 = vld [vmem:[#allocation2 + $0x190] sm:$0xf]
    %v2467 = vld [vmem:[#allocation2 + $0x194] sm:$0xf]
    %v2468 = vld [vmem:[#allocation2 + $0x198] sm:$0xf]
    %v2469 = vld [vmem:[#allocation2 + $0x19c] sm:$0xf]
    %v2470 = vld [vmem:[#allocation2 + $0x1a0] sm:$0xf]
    %v2471 = vld [vmem:[#allocation2 + $0x1a4] sm:$0xf]
    %v2472 = vld [vmem:[#allocation2 + $0x1a8] sm:$0xf]
    %v2473 = vld [vmem:[#allocation2 + $0x1ac] sm:$0xf]
    %v2474 = vld [vmem:[#allocation2 + $0x1b0] sm:$0xf]
    %v2475 = vld [vmem:[#allocation2 + $0x1b4] sm:$0xf]
    %v2476 = vld [vmem:[#allocation2 + $0x1b8] sm:$0xf]
    %v2477 = vld [vmem:[#allocation2 + $0x1bc] sm:$0xf]
    %v2478 = vld [vmem:[#allocation2 + $0x1c0] sm:$0xf]
    %v2479 = vld [vmem:[#allocation2 + $0x1c4] sm:$0xf]
    %v2480 = vld [vmem:[#allocation2 + $0x1c8] sm:$0xf]
    %v2481 = vld [vmem:[#allocation2 + $0x1cc] sm:$0xf]
    %v2482 = vld [vmem:[#allocation2 + $0x1d0] sm:$0xf]
    %v2483 = vld [vmem:[#allocation2 + $0x1d4] sm:$0xf]
    %v2484 = vld [vmem:[#allocation2 + $0x1d8] sm:$0xf]
    %v2485 = vld [vmem:[#allocation2 + $0x1dc] sm:$0xf]
    %v2486 = vld [vmem:[#allocation2 + $0x1e0] sm:$0xf]
    %v2487 = vld [vmem:[#allocation2 + $0x1e4] sm:$0xf]
    %v2488 = vld [vmem:[#allocation2 + $0x1e8] sm:$0xf]
    %v2489 = vld [vmem:[#allocation2 + $0x1ec] sm:$0xf]
    %v2490 = vld [vmem:[#allocation2 + $0x1f0] sm:$0xf]
    %v2491 = vld [vmem:[#allocation2 + $0x1f4] sm:$0xf]
    %v2492 = vld [vmem:[#allocation2 + $0x1f8] sm:$0xf]
    %v2493 = vld [vmem:[#allocation2 + $0x1fc] sm:$0xf]
    %v2494 = vpack.c.bf16 %v2355, %v2354
    %v2495 = vpack.c.bf16 %v2357, %v2356
    %v2496 = vpack.c.bf16 %v2359, %v2358
    %v2497 = vpack.c.bf16 %v2361, %v2360
    %v2498 = vunpack.c.l.bf16 %v2494
    %v2499 = vunpack.c.h.bf16 %v2494
    %v2500 = vunpack.c.l.bf16 %v2495
    %v2501 = vunpack.c.h.bf16 %v2495
    %v2502 = vunpack.c.l.bf16 %v2496
    %v2503 = vunpack.c.h.bf16 %v2496
    %v2504 = vunpack.c.l.bf16 %v2497
    %v2505 = vunpack.c.h.bf16 %v2497
    %v2506 = vsub.f32 %v2354, %v2498
    %v2507 = vsub.f32 %v2355, %v2499
    %v2508 = vsub.f32 %v2356, %v2500
    %v2509 = vsub.f32 %v2357, %v2501
    %v2510 = vsub.f32 %v2358, %v2502
    %v2511 = vsub.f32 %v2359, %v2503
    %v2512 = vsub.f32 %v2360, %v2504
    %v2513 = vsub.f32 %v2361, %v2505
    %v2514 = vpack.c.bf16 %v2507, %v2506
    %v2515 = vpack.c.bf16 %v2509, %v2508
    %v2516 = vpack.c.bf16 %v2511, %v2510
    %v2517 = vpack.c.bf16 %v2513, %v2512
    %v2522 = vunpack.c.l.b16 %v2494
    %v2523 = vunpack.c.h.b16 %v2494
    %v2524 = vunpack.c.l.b16 %v2495
    %v2525 = vunpack.c.h.b16 %v2495
    %v2526 = vunpack.c.l.b16 %v2496
    %v2527 = vunpack.c.h.b16 %v2496
    %v2528 = vunpack.c.l.b16 %v2497
    %v2529 = vunpack.c.h.b16 %v2497
    %v2530 = vpack.c.b16 %v2522, %v2522
    %v2531 = vpack.c.b16 %v2523, %v2523
    %v2532 = vpack.c.b16 %v2524, %v2524
    %v2533 = vpack.c.b16 %v2525, %v2525
    %v2534 = vpack.c.b16 %v2526, %v2526
    %v2535 = vpack.c.b16 %v2527, %v2527
    %v2536 = vpack.c.b16 %v2528, %v2528
    %v2537 = vpack.c.b16 %v2529, %v2529
    %v2542 = vunpack.c.l.b16 %v2514
    %v2543 = vunpack.c.h.b16 %v2514
    %v2544 = vunpack.c.l.b16 %v2515
    %v2545 = vunpack.c.h.b16 %v2515
    %v2546 = vunpack.c.l.b16 %v2516
    %v2547 = vunpack.c.h.b16 %v2516
    %v2548 = vunpack.c.l.b16 %v2517
    %v2549 = vunpack.c.h.b16 %v2517
    %v2550 = vpack.c.b16 %v2542, %v2542
    %v2551 = vpack.c.b16 %v2543, %v2543
    %v2552 = vpack.c.b16 %v2544, %v2544
    %v2553 = vpack.c.b16 %v2545, %v2545
    %v2554 = vpack.c.b16 %v2546, %v2546
    %v2555 = vpack.c.b16 %v2547, %v2547
    %v2556 = vpack.c.b16 %v2548, %v2548
    %v2557 = vpack.c.b16 %v2549, %v2549
    %v2558 = vrot.slane %v2550, 7
    %v2559 = vrot.slane %v2551, 7
    %v2560 = vrot.slane %v2552, 7
    %v2561 = vrot.slane %v2553, 7
    %v2562 = vrot.slane %v2554, 7
    %v2563 = vrot.slane %v2555, 7
    %v2564 = vrot.slane %v2556, 7
    %v2565 = vrot.slane %v2557, 7
    %v2568 = vsel %vm230, %v2530, %v2558
    %v2572 = vsel %vm230, %v2531, %v2559
    %v2576 = vsel %vm230, %v2532, %v2560
    %v2580 = vsel %vm230, %v2533, %v2561
    %v2584 = vsel %vm230, %v2534, %v2562
    %v2588 = vsel %vm230, %v2535, %v2563
    %v2592 = vsel %vm230, %v2536, %v2564
    %v2596 = vsel %vm230, %v2537, %v2565
    %v2726 = vunpack.c.l.b16 %v2366
    %v2727 = vunpack.c.l.b16 %v2367
    %v2728 = vunpack.c.l.b16 %v2368
    %v2729 = vunpack.c.l.b16 %v2369
    %v2730 = vunpack.c.l.b16 %v2370
    %v2731 = vunpack.c.l.b16 %v2371
    %v2732 = vunpack.c.l.b16 %v2372
    %v2733 = vunpack.c.l.b16 %v2373
    %v2734 = vunpack.c.l.b16 %v2374
    %v2735 = vunpack.c.l.b16 %v2375
    %v2736 = vunpack.c.l.b16 %v2376
    %v2737 = vunpack.c.l.b16 %v2377
    %v2738 = vunpack.c.l.b16 %v2378
    %v2739 = vunpack.c.l.b16 %v2379
    %v2740 = vunpack.c.l.b16 %v2380
    %v2741 = vunpack.c.l.b16 %v2381
    %v2742 = vunpack.c.l.b16 %v2382
    %v2743 = vunpack.c.l.b16 %v2383
    %v2744 = vunpack.c.l.b16 %v2384
    %v2745 = vunpack.c.l.b16 %v2385
    %v2746 = vunpack.c.l.b16 %v2386
    %v2747 = vunpack.c.l.b16 %v2387
    %v2748 = vunpack.c.l.b16 %v2388
    %v2749 = vunpack.c.l.b16 %v2389
    %v2750 = vunpack.c.l.b16 %v2390
    %v2751 = vunpack.c.l.b16 %v2391
    %v2752 = vunpack.c.l.b16 %v2392
    %v2753 = vunpack.c.l.b16 %v2393
    %v2754 = vunpack.c.l.b16 %v2394
    %v2755 = vunpack.c.l.b16 %v2395
    %v2756 = vunpack.c.l.b16 %v2396
    %v2757 = vunpack.c.l.b16 %v2397
    %v2758 = vunpack.c.l.b16 %v2398
    %v2759 = vunpack.c.l.b16 %v2399
    %v2760 = vunpack.c.l.b16 %v2400
    %v2761 = vunpack.c.l.b16 %v2401
    %v2762 = vunpack.c.l.b16 %v2402
    %v2763 = vunpack.c.l.b16 %v2403
    %v2764 = vunpack.c.l.b16 %v2404
    %v2765 = vunpack.c.l.b16 %v2405
    %v2766 = vunpack.c.l.b16 %v2406
    %v2767 = vunpack.c.l.b16 %v2407
    %v2768 = vunpack.c.l.b16 %v2408
    %v2769 = vunpack.c.l.b16 %v2409
    %v2770 = vunpack.c.l.b16 %v2410
    %v2771 = vunpack.c.l.b16 %v2411
    %v2772 = vunpack.c.l.b16 %v2412
    %v2773 = vunpack.c.l.b16 %v2413
    %v2774 = vunpack.c.l.b16 %v2414
    %v2775 = vunpack.c.l.b16 %v2415
    %v2776 = vunpack.c.l.b16 %v2416
    %v2777 = vunpack.c.l.b16 %v2417
    %v2778 = vunpack.c.l.b16 %v2418
    %v2779 = vunpack.c.l.b16 %v2419
    %v2780 = vunpack.c.l.b16 %v2420
    %v2781 = vunpack.c.l.b16 %v2421
    %v2782 = vunpack.c.l.b16 %v2422
    %v2783 = vunpack.c.l.b16 %v2423
    %v2784 = vunpack.c.l.b16 %v2424
    %v2785 = vunpack.c.l.b16 %v2425
    %v2786 = vunpack.c.l.b16 %v2426
    %v2787 = vunpack.c.l.b16 %v2427
    %v2788 = vunpack.c.l.b16 %v2428
    %v2789 = vunpack.c.l.b16 %v2429
    %v2790 = vunpack.c.l.b16 %v2430
    %v2791 = vunpack.c.l.b16 %v2431
    %v2792 = vunpack.c.l.b16 %v2432
    %v2793 = vunpack.c.l.b16 %v2433
    %v2794 = vunpack.c.l.b16 %v2434
    %v2795 = vunpack.c.l.b16 %v2435
    %v2796 = vunpack.c.l.b16 %v2436
    %v2797 = vunpack.c.l.b16 %v2437
    %v2798 = vunpack.c.l.b16 %v2438
    %v2799 = vunpack.c.l.b16 %v2439
    %v2800 = vunpack.c.l.b16 %v2440
    %v2801 = vunpack.c.l.b16 %v2441
    %v2802 = vunpack.c.l.b16 %v2442
    %v2803 = vunpack.c.l.b16 %v2443
    %v2804 = vunpack.c.l.b16 %v2444
    %v2805 = vunpack.c.l.b16 %v2445
    %v2806 = vunpack.c.l.b16 %v2446
    %v2807 = vunpack.c.l.b16 %v2447
    %v2808 = vunpack.c.l.b16 %v2448
    %v2809 = vunpack.c.l.b16 %v2449
    %v2810 = vunpack.c.l.b16 %v2450
    %v2811 = vunpack.c.l.b16 %v2451
    %v2812 = vunpack.c.l.b16 %v2452
    %v2813 = vunpack.c.l.b16 %v2453
    %v2814 = vunpack.c.l.b16 %v2454
    %v2815 = vunpack.c.l.b16 %v2455
    %v2816 = vunpack.c.l.b16 %v2456
    %v2817 = vunpack.c.l.b16 %v2457
    %v2818 = vunpack.c.l.b16 %v2458
    %v2819 = vunpack.c.l.b16 %v2459
    %v2820 = vunpack.c.l.b16 %v2460
    %v2821 = vunpack.c.l.b16 %v2461
    %v2822 = vunpack.c.l.b16 %v2462
    %v2823 = vunpack.c.l.b16 %v2463
    %v2824 = vunpack.c.l.b16 %v2464
    %v2825 = vunpack.c.l.b16 %v2465
    %v2826 = vunpack.c.l.b16 %v2466
    %v2827 = vunpack.c.l.b16 %v2467
    %v2828 = vunpack.c.l.b16 %v2468
    %v2829 = vunpack.c.l.b16 %v2469
    %v2830 = vunpack.c.l.b16 %v2470
    %v2831 = vunpack.c.l.b16 %v2471
    %v2832 = vunpack.c.l.b16 %v2472
    %v2833 = vunpack.c.l.b16 %v2473
    %v2834 = vunpack.c.l.b16 %v2474
    %v2835 = vunpack.c.l.b16 %v2475
    %v2836 = vunpack.c.l.b16 %v2476
    %v2837 = vunpack.c.l.b16 %v2477
    %v2838 = vunpack.c.l.b16 %v2478
    %v2839 = vunpack.c.l.b16 %v2479
    %v2840 = vunpack.c.l.b16 %v2480
    %v2841 = vunpack.c.l.b16 %v2481
    %v2842 = vunpack.c.l.b16 %v2482
    %v2843 = vunpack.c.l.b16 %v2483
    %v2844 = vunpack.c.l.b16 %v2484
    %v2845 = vunpack.c.l.b16 %v2485
    %v2846 = vunpack.c.l.b16 %v2486
    %v2847 = vunpack.c.l.b16 %v2487
    %v2848 = vunpack.c.l.b16 %v2488
    %v2849 = vunpack.c.l.b16 %v2489
    %v2850 = vunpack.c.l.b16 %v2490
    %v2851 = vunpack.c.l.b16 %v2491
    %v2852 = vunpack.c.l.b16 %v2492
    %v2853 = vunpack.c.l.b16 %v2493
    %v2854 = vpack.c.b16 %v2727, %v2726
    %v2855 = vpack.c.b16 %v2729, %v2728
    %v2856 = vpack.c.b16 %v2731, %v2730
    %v2857 = vpack.c.b16 %v2733, %v2732
    %v2858 = vpack.c.b16 %v2735, %v2734
    %v2859 = vpack.c.b16 %v2737, %v2736
    %v2860 = vpack.c.b16 %v2739, %v2738
    %v2861 = vpack.c.b16 %v2741, %v2740
    %v2862 = vpack.c.b16 %v2743, %v2742
    %v2863 = vpack.c.b16 %v2745, %v2744
    %v2864 = vpack.c.b16 %v2747, %v2746
    %v2865 = vpack.c.b16 %v2749, %v2748
    %v2866 = vpack.c.b16 %v2751, %v2750
    %v2867 = vpack.c.b16 %v2753, %v2752
    %v2868 = vpack.c.b16 %v2755, %v2754
    %v2869 = vpack.c.b16 %v2757, %v2756
    %v2870 = vpack.c.b16 %v2759, %v2758
    %v2871 = vpack.c.b16 %v2761, %v2760
    %v2872 = vpack.c.b16 %v2763, %v2762
    %v2873 = vpack.c.b16 %v2765, %v2764
    %v2874 = vpack.c.b16 %v2767, %v2766
    %v2875 = vpack.c.b16 %v2769, %v2768
    %v2876 = vpack.c.b16 %v2771, %v2770
    %v2877 = vpack.c.b16 %v2773, %v2772
    %v2878 = vpack.c.b16 %v2775, %v2774
    %v2879 = vpack.c.b16 %v2777, %v2776
    %v2880 = vpack.c.b16 %v2779, %v2778
    %v2881 = vpack.c.b16 %v2781, %v2780
    %v2882 = vpack.c.b16 %v2783, %v2782
    %v2883 = vpack.c.b16 %v2785, %v2784
    %v2884 = vpack.c.b16 %v2787, %v2786
    %v2885 = vpack.c.b16 %v2789, %v2788
    %v2886 = vpack.c.b16 %v2791, %v2790
    %v2887 = vpack.c.b16 %v2793, %v2792
    %v2888 = vpack.c.b16 %v2795, %v2794
    %v2889 = vpack.c.b16 %v2797, %v2796
    %v2890 = vpack.c.b16 %v2799, %v2798
    %v2891 = vpack.c.b16 %v2801, %v2800
    %v2892 = vpack.c.b16 %v2803, %v2802
    %v2893 = vpack.c.b16 %v2805, %v2804
    %v2894 = vpack.c.b16 %v2807, %v2806
    %v2895 = vpack.c.b16 %v2809, %v2808
    %v2896 = vpack.c.b16 %v2811, %v2810
    %v2897 = vpack.c.b16 %v2813, %v2812
    %v2898 = vpack.c.b16 %v2815, %v2814
    %v2899 = vpack.c.b16 %v2817, %v2816
    %v2900 = vpack.c.b16 %v2819, %v2818
    %v2901 = vpack.c.b16 %v2821, %v2820
    %v2902 = vpack.c.b16 %v2823, %v2822
    %v2903 = vpack.c.b16 %v2825, %v2824
    %v2904 = vpack.c.b16 %v2827, %v2826
    %v2905 = vpack.c.b16 %v2829, %v2828
    %v2906 = vpack.c.b16 %v2831, %v2830
    %v2907 = vpack.c.b16 %v2833, %v2832
    %v2908 = vpack.c.b16 %v2835, %v2834
    %v2909 = vpack.c.b16 %v2837, %v2836
    %v2910 = vpack.c.b16 %v2839, %v2838
    %v2911 = vpack.c.b16 %v2841, %v2840
    %v2912 = vpack.c.b16 %v2843, %v2842
    %v2913 = vpack.c.b16 %v2845, %v2844
    %v2914 = vpack.c.b16 %v2847, %v2846
    %v2915 = vpack.c.b16 %v2849, %v2848
    %v2916 = vpack.c.b16 %v2851, %v2850
    %v2917 = vpack.c.b16 %v2853, %v2852
    %2982 = vmatpush.bf16.msra.mxu0 %v2861
    %2983 = vmatpush.bf16.msra.mxu0 %v2860
    %2984 = vmatpush.bf16.msra.mxu0 %v2859
    %2985 = vmatpush.bf16.msra.mxu0 %v2858
    %2986 = vmatpush.bf16.msra.mxu0 %v2857
    %2987 = vmatpush.bf16.msra.mxu0 %v2856
    %2988 = vmatpush.bf16.msra.mxu0 %v2855
    %2989 = vmatpush.bf16.msra.mxu0 %v2854
    %2990 = vmatmul.bf16.gmra.mxu0 %v2568
    %v2991 = vpop.f32.mrf.mxu0
    %v2992 = vadd.f32 0.0, %v2991
    %v2993 = vpop.f32.mrf.mxu0
    %2994 = vdwg.mxu0
    %2995 = vmatpush.bf16.msra.mxu0 %v2869
    %2996 = vmatpush.bf16.msra.mxu0 %v2868
    %2997 = vmatpush.bf16.msra.mxu0 %v2867
    %2998 = vmatpush.bf16.msra.mxu0 %v2866
    %2999 = vmatpush.bf16.msra.mxu0 %v2865
    %3000 = vmatpush.bf16.msra.mxu0 %v2864
    %3001 = vmatpush.bf16.msra.mxu0 %v2863
    %3002 = vmatpush.bf16.msra.mxu0 %v2862
    %3003 = vmatmul.bf16.gmra.mxu0 %v2572
    %v3004 = vpop.f32.mrf.mxu0
    %v3005 = vadd.f32 %v2992, %v3004
    %v3006 = vpop.f32.mrf.mxu0
    %3007 = vdwg.mxu0
    %3008 = vmatpush.bf16.msra.mxu0 %v2877
    %3009 = vmatpush.bf16.msra.mxu0 %v2876
    %3010 = vmatpush.bf16.msra.mxu0 %v2875
    %3011 = vmatpush.bf16.msra.mxu0 %v2874
    %3012 = vmatpush.bf16.msra.mxu0 %v2873
    %3013 = vmatpush.bf16.msra.mxu0 %v2872
    %3014 = vmatpush.bf16.msra.mxu0 %v2871
    %3015 = vmatpush.bf16.msra.mxu0 %v2870
    %3016 = vmatmul.bf16.gmra.mxu0 %v2576
    %v3017 = vpop.f32.mrf.mxu0
    %v3018 = vadd.f32 %v3005, %v3017
    %v3019 = vpop.f32.mrf.mxu0
    %3020 = vdwg.mxu0
    %3021 = vmatpush.bf16.msra.mxu0 %v2885
    %3022 = vmatpush.bf16.msra.mxu0 %v2884
    %3023 = vmatpush.bf16.msra.mxu0 %v2883
    %3024 = vmatpush.bf16.msra.mxu0 %v2882
    %3025 = vmatpush.bf16.msra.mxu0 %v2881
    %3026 = vmatpush.bf16.msra.mxu0 %v2880
    %3027 = vmatpush.bf16.msra.mxu0 %v2879
    %3028 = vmatpush.bf16.msra.mxu0 %v2878
    %3029 = vmatmul.bf16.gmra.mxu0 %v2580
    %v3030 = vpop.f32.mrf.mxu0
    %v3031 = vadd.f32 %v3018, %v3030
    %v3032 = vpop.f32.mrf.mxu0
    %3033 = vdwg.mxu0
    %3034 = vmatpush.bf16.msra.mxu0 %v2893
    %3035 = vmatpush.bf16.msra.mxu0 %v2892
    %3036 = vmatpush.bf16.msra.mxu0 %v2891
    %3037 = vmatpush.bf16.msra.mxu0 %v2890
    %3038 = vmatpush.bf16.msra.mxu0 %v2889
    %3039 = vmatpush.bf16.msra.mxu0 %v2888
    %3040 = vmatpush.bf16.msra.mxu0 %v2887
    %3041 = vmatpush.bf16.msra.mxu0 %v2886
    %3042 = vmatmul.bf16.gmra.mxu0 %v2584
    %v3043 = vpop.f32.mrf.mxu0
    %v3044 = vadd.f32 %v3031, %v3043
    %v3045 = vpop.f32.mrf.mxu0
    %3046 = vdwg.mxu0
    %3047 = vmatpush.bf16.msra.mxu0 %v2901
    %3048 = vmatpush.bf16.msra.mxu0 %v2900
    %3049 = vmatpush.bf16.msra.mxu0 %v2899
    %3050 = vmatpush.bf16.msra.mxu0 %v2898
    %3051 = vmatpush.bf16.msra.mxu0 %v2897
    %3052 = vmatpush.bf16.msra.mxu0 %v2896
    %3053 = vmatpush.bf16.msra.mxu0 %v2895
    %3054 = vmatpush.bf16.msra.mxu0 %v2894
    %3055 = vmatmul.bf16.gmra.mxu0 %v2588
    %v3056 = vpop.f32.mrf.mxu0
    %v3057 = vadd.f32 %v3044, %v3056
    %v3058 = vpop.f32.mrf.mxu0
    %3059 = vdwg.mxu0
    %3060 = vmatpush.bf16.msra.mxu0 %v2909
    %3061 = vmatpush.bf16.msra.mxu0 %v2908
    %3062 = vmatpush.bf16.msra.mxu0 %v2907
    %3063 = vmatpush.bf16.msra.mxu0 %v2906
    %3064 = vmatpush.bf16.msra.mxu0 %v2905
    %3065 = vmatpush.bf16.msra.mxu0 %v2904
    %3066 = vmatpush.bf16.msra.mxu0 %v2903
    %3067 = vmatpush.bf16.msra.mxu0 %v2902
    %3068 = vmatmul.bf16.gmra.mxu0 %v2592
    %v3069 = vpop.f32.mrf.mxu0
    %v3070 = vadd.f32 %v3057, %v3069
    %v3071 = vpop.f32.mrf.mxu0
    %3072 = vdwg.mxu0
    %3073 = vmatpush.bf16.msra.mxu0 %v2917
    %3074 = vmatpush.bf16.msra.mxu0 %v2916
    %3075 = vmatpush.bf16.msra.mxu0 %v2915
    %3076 = vmatpush.bf16.msra.mxu0 %v2914
    %3077 = vmatpush.bf16.msra.mxu0 %v2913
    %3078 = vmatpush.bf16.msra.mxu0 %v2912
    %3079 = vmatpush.bf16.msra.mxu0 %v2911
    %3080 = vmatpush.bf16.msra.mxu0 %v2910
    %3081 = vmatmul.bf16.gmra.mxu0 %v2596
    %v3082 = vpop.f32.mrf.mxu0
    %v3083 = vadd.f32 %v3070, %v3082
    %v3084 = vpop.f32.mrf.mxu0
    %3085 = vdwg.mxu0
    %v3087 = vrot.slane %v3083, 2
    %v3089 = vadd.f32 %v3083, %v3087
    %v3090 = vld [vmem:[#allocation7 + $0x41] ss:$0 sm:$0xff]
    %v3091 = vadd.f32 %v3089, %v3090
    %3092 = vst [vmem:[#allocation9] sm:$0x3] %v3091
    // Predicated region
    $region57: #{fused_forward.1} parent=1 // pred_check
      _
    $region58: #{fused_forward.1} parent=1 // pred_check_branch
      %3094 = sbr.rel (0) target = $region60
    $region59: #{fused_forward.1} parent=1 // pred_region
      %3096 = vsyncadd [#allocation6], 0
      %s3098 = sshll.u32 [#allocation9], 4
      %s3099 = int_to_ptr.vmem [resolvable:$true] %s3098
      %s3100 = sshll.u32 %s8, 4
      %s3101 = int_to_ptr.hbm [resolvable:$true] %s3100
      %3103 = dma.vmem_to_hbm [thread:$0]  %s3099, 32, %s3101, [#allocation6]
    $region60: #{fused_forward.1} parent=1 // pred_fallthru
      _
    // Predicated region
    $region61: #{fused_forward.1} parent=1 // pred_check
      _
    $region62: #{fused_forward.1} parent=1 // pred_check_branch
      %3105 = sbr.rel (0) target = $region64
    $region63: #{fused_forward.1} parent=1 // pred_region
      %3107 = dma.done [#allocation6], 32
    $region64: #{fused_forward.1} parent=1 // pred_fallthru
      _
    %3108 = vsyncpa [#allocation5], 1
    %3109 = vsyncpa [#allocation8], 1
    %3110 = vsyncpa [#allocation6], 1
  %3111 = vsyncmov [#allocation3]
  %s3112 = vpop.sfrf %3111
  %p3113 = scmp.eq.s32.totalorder %s3112, 0
  %p3114 = pneg %p3113
  %3116 = shalt.err (%p3114)

</llo_original>
